<compile_context>
chip_gen: v7x
topology: tpu7x:2x2x1
jax: 0.10.0
libtpu: 0.0.40
codegen_flags: <defaults>
</compile_context>

<pallas_src>
import functools
import math

import jax
import jax.numpy as jnp
from jax import lax
from jax.experimental import pallas as pl
from jax.experimental.pallas import tpu as pltpu


def _resblock_kernel(x_ref, w1_ref, s1_ref, b1_ref, w2_ref, s2_ref, b2_ref, o_ref,
                     *, h, lane_lo, lane_hi):
    # x_ref : (HG, L) f32, L = WG*C; image occupies rows [2, 2+H), lanes [lane_lo, lane_hi),
    #         zeros elsewhere (wrapper-provided padding).
    # w*_ref: (3, L, L) bf16 banded conv weights (dx taps folded in), index = dy.
    # s*/b* : (1, L) f32 folded BN scale / bias (per-channel, tiled across WG columns).
    # o_ref : (H, L) f32 (image rows only; wrapper slices the image columns out).
    HG, L = x_ref.shape
    HM = HG - 2                       # rows of the conv1 / intermediate grid (G rows [1, HG-1))

    xg = x_ref[...]                   # f32, kept for the residual
    xb = xg.astype(jnp.bfloat16)      # bf16 copy for the MXU

    # ---- conv1: 3 row-shifted dense matmuls (dx handled inside the banded weights) ----
    acc1 = jnp.dot(xb[0:HM, :], w1_ref[0], preferred_element_type=jnp.float32)
    for dy in (1, 2):
        acc1 = acc1 + jnp.dot(xb[dy:dy + HM, :], w1_ref[dy],
                              preferred_element_type=jnp.float32)

    # ---- folded BN1 + LeakyReLU(0.1) ----
    mid = acc1 * s1_ref[...] + b1_ref[...]
    mid = jnp.where(mid >= 0, mid, 0.1 * mid)

    # ---- zero everything outside the image: this IS the 1-pixel zero padding conv2 sees ----
    row = lax.broadcasted_iota(jnp.int32, (HM, L), 0)
    col = lax.broadcasted_iota(jnp.int32, (HM, L), 1)
    inside = (row >= 1) & (row < 1 + h) & (col >= lane_lo) & (col < lane_hi)
    mid = jnp.where(inside, mid, 0.0)
    mb = mid.astype(jnp.bfloat16)

    # ---- conv2: 3 more row-shifted dense matmuls ----
    acc2 = jnp.dot(mb[0:h, :], w2_ref[0], preferred_element_type=jnp.float32)
    for dy in (1, 2):
        acc2 = acc2 + jnp.dot(mb[dy:dy + h, :], w2_ref[dy],
                              preferred_element_type=jnp.float32)

    # ---- folded BN2 + residual + LeakyReLU(0.1) ----
    out = acc2 * s2_ref[...] + b2_ref[...]
    out = out + xg[2:2 + h, :]                       # residual (zero in padding lanes)
    o_ref[...] = jnp.where(out >= 0, out, 0.1 * out)


def _build_banded(w_dydx, wg):
    """w_dydx: (3, 3, Cin, Cout).  Returns (3, WG*C, WG*C) banded matrices B with
    B[dy, bi*C+ci, bo*C+co] = w_dydx[dy, bi-bo+1, ci, co] when bi-bo+1 in {0,1,2}, else 0,
    so a conv tap over the W axis becomes part of a single dense lane-axis matmul."""
    c = w_dydx.shape[-1]
    l = wg * c
    ii = jnp.arange(l)
    jj = jnp.arange(l)
    b_in, ci = ii // c, ii % c
    b_out, co = jj // c, jj % c
    dx = b_in[:, None] - b_out[None, :] + 1
    valid = (dx >= 0) & (dx <= 2)
    dxc = jnp.clip(dx, 0, 2)
    banded = w_dydx[:, dxc, ci[:, None], co[None, :]]        # (3, L, L)
    return jnp.where(valid[None, :, :], banded, 0.0)


def resblock_pallas(x_nhwc, w1_oihw, w2_oihw, s1, b1, s2, b2):
    """x_nhwc: (N, H, W, C) f32.  w*_oihw: (C, C, 3, 3) PyTorch conv weights.
    s*/b*: (C,) folded BatchNorm scale / bias."""
    N, H, W, C = x_nhwc.shape
    assert w1_oihw.shape == (C, C, 3, 3) and w2_oihw.shape == (C, C, 3, 3)

    # Lane-dense working width: smallest WG >= W+4 with WG*C a multiple of 128.
    wg_step = 128 // math.gcd(128, C)
    WG = ((W + 4 + wg_step - 1) // wg_step) * wg_step
    L = WG * C
    HG = H + 4
    r0, c0 = 2, 2                     # image offset inside the working grid

    # Pack input into the zero-padded, lane-dense working layout (cheap XLA pad/reshape).
    xg = jnp.zeros((N, HG, WG, C), jnp.float32)
    xg = xg.at[:, r0:r0 + H, c0:c0 + W, :].set(x_nhwc.astype(jnp.float32))
    xg = xg.reshape(N, HG, L)

    # Banded conv weights (dx folded into the lane axis), cast to bf16 for the MXU.
    w1_dydx = jnp.transpose(w1_oihw, (2, 3, 1, 0))            # (kh, kw, Cin, Cout)
    w2_dydx = jnp.transpose(w2_oihw, (2, 3, 1, 0))
    B1 = _build_banded(w1_dydx, WG).astype(jnp.bfloat16)
    B2 = _build_banded(w2_dydx, WG).astype(jnp.bfloat16)

    # Folded BN scale/bias tiled across the WG columns -> (1, L).
    s1_t = jnp.tile(s1.reshape(-1), WG)[None, :].astype(jnp.float32)
    b1_t = jnp.tile(b1.reshape(-1), WG)[None, :].astype(jnp.float32)
    s2_t = jnp.tile(s2.reshape(-1), WG)[None, :].astype(jnp.float32)
    b2_t = jnp.tile(b2.reshape(-1), WG)[None, :].astype(jnp.float32)

    kernel = functools.partial(_resblock_kernel, h=H,
                               lane_lo=c0 * C, lane_hi=(c0 + W) * C)

    grid_spec = pltpu.PrefetchScalarGridSpec(
        num_scalar_prefetch=0,
        grid=(N,),
        in_specs=[
            pl.BlockSpec((None, HG, L), lambda n: (n, 0, 0)),   # squeezed batch dim
            pl.BlockSpec((3, L, L), lambda n: (0, 0, 0)),
            pl.BlockSpec((1, L), lambda n: (0, 0)),
            pl.BlockSpec((1, L), lambda n: (0, 0)),
            pl.BlockSpec((3, L, L), lambda n: (0, 0, 0)),
            pl.BlockSpec((1, L), lambda n: (0, 0)),
            pl.BlockSpec((1, L), lambda n: (0, 0)),
        ],
        out_specs=pl.BlockSpec((None, H, L), lambda n: (n, 0, 0)),
    )

    out = pl.pallas_call(
        kernel,
        out_shape=jax.ShapeDtypeStruct((N, H, L), jnp.float32),
        grid_spec=grid_spec,
        compiler_params=pltpu.CompilerParams(
            dimension_semantics=("parallel",)),
    )(xg, B1, s1_t, b1_t, B2, s2_t, b2_t)

    # Drop the padding columns: (N, H, L) -> (N, H, W, C)  (cheap XLA slice).
    return out.reshape(N, H, WG, C)[:, :, c0:c0 + W, :]


def _fold_bn(gamma, beta, mean, var, eps=1e-5):
    scale = gamma / jnp.sqrt(var + eps)
    return scale, beta - mean * scale


def _reference_nhwc(x_nhwc, w1_oihw, w2_oihw, s1, b1, s2, b2):
    """Pure-JAX reference (lax.conv, bf16 conv operands to match the kernel's MXU dtype)."""
    dn = ('NHWC', 'HWIO', 'NHWC')
    w1 = jnp.transpose(w1_oihw, (2, 3, 1, 0)).astype(jnp.bfloat16)
    w2 = jnp.transpose(w2_oihw, (2, 3, 1, 0)).astype(jnp.bfloat16)
    out = lax.conv_general_dilated(x_nhwc.astype(jnp.bfloat16), w1, (1, 1), 'SAME',
                                   dimension_numbers=dn,
                                   preferred_element_type=jnp.float32)
    out = out * s1 + b1
    out = jnp.where(out >= 0, out, 0.1 * out)
    out = lax.conv_general_dilated(out.astype(jnp.bfloat16), w2, (1, 1), 'SAME',
                                   dimension_numbers=dn,
                                   preferred_element_type=jnp.float32)
    out = out * s2 + b2 + x_nhwc
    return jnp.where(out >= 0, out, 0.1 * out)


if __name__ == "__main__":
    key = jax.random.PRNGKey(0)
    N, C, H, W = 2, 8, 16, 16   # in_channel == out_channel (required by the residual add)

    ks = jax.random.split(key, 9)
    # PyTorch-style conv weights: (out, in, kh, kw), no bias.
    w1_oihw = 0.1 * jax.random.normal(ks[0], (C, C, 3, 3), jnp.float32)
    w2_oihw = 0.1 * jax.random.normal(ks[1], (C, C, 3, 3), jnp.float32)
    # BatchNorm (inference / running-stats) parameters.
    g1 = 1.0 + 0.1 * jax.random.normal(ks[2], (C,), jnp.float32)
    be1 = 0.1 * jax.random.normal(ks[3], (C,), jnp.float32)
    m1 = 0.1 * jax.random.normal(ks[4], (C,), jnp.float32)
    v1 = jnp.abs(1.0 + 0.1 * jax.random.normal(ks[5], (C,), jnp.float32))
    g2 = 1.0 + 0.1 * jax.random.normal(ks[6], (C,), jnp.float32)
    be2 = 0.1 * jax.random.normal(ks[7], (C,), jnp.float32)
    m2 = jnp.zeros((C,), jnp.float32)
    v2 = jnp.ones((C,), jnp.float32)
    # TODO(synk): training-mode BatchNorm (batch statistics) is not implemented;
    # this uses the inference-mode affine fold.

    s1, b1 = _fold_bn(g1, be1, m1, v1)
    s2, b2 = _fold_bn(g2, be2, m2, v2)

    # Input in PyTorch NCHW, converted to NHWC for the kernel.
    x_nchw = jax.random.normal(ks[8], (N, C, H, W), jnp.float32)
    x_nhwc = jnp.transpose(x_nchw, (0, 2, 3, 1))

    out_nhwc = resblock_pallas(x_nhwc, w1_oihw, w2_oihw, s1, b1, s2, b2)
    out_nhwc = jax.block_until_ready(out_nhwc)
    out_nchw = jnp.transpose(out_nhwc, (0, 3, 1, 2))

    ref_nhwc = _reference_nhwc(x_nhwc, w1_oihw, w2_oihw, s1, b1, s2, b2)
    max_err = float(jnp.max(jnp.abs(out_nhwc - ref_nhwc)))
    assert jnp.allclose(out_nhwc, ref_nhwc, atol=2e-2, rtol=2e-2), max_err
    print("KERNEL_OK")
</pallas_src>

<mosaic_0001>
module attributes {stable_mosaic.version = 11 : i64} {
  func.func @_resblock_kernel(%arg0: i32, %arg1: memref<1x20x256xf32, #tpu.memory_space<vmem>>, %arg2: memref<3x256x256xbf16, #tpu.memory_space<vmem>>, %arg3: memref<1x256xf32, #tpu.memory_space<vmem>>, %arg4: memref<1x256xf32, #tpu.memory_space<vmem>>, %arg5: memref<3x256x256xbf16, #tpu.memory_space<vmem>>, %arg6: memref<1x256xf32, #tpu.memory_space<vmem>>, %arg7: memref<1x256xf32, #tpu.memory_space<vmem>>, %arg8: memref<1x16x256xf32, #tpu.memory_space<vmem>>) attributes {dimension_semantics = [#tpu.dimension_semantics<parallel>], iteration_bounds = array<i64: 2>, scalar_prefetch = 0 : i64, scratch_operands = 0 : i64, tpu.core_type = #tpu.core_type<tc>, window_params = [{transform_indices = @transform_0, window_bounds = array<i64: 1, 20, 256>}, {pipeline_mode = #tpu.pipeline_mode<synchronous>, transform_indices = @transform_1, window_bounds = array<i64: 3, 256, 256>}, {pipeline_mode = #tpu.pipeline_mode<synchronous>, transform_indices = @transform_2, window_bounds = array<i64: 1, 256>}, {pipeline_mode = #tpu.pipeline_mode<synchronous>, transform_indices = @transform_3, window_bounds = array<i64: 1, 256>}, {pipeline_mode = #tpu.pipeline_mode<synchronous>, transform_indices = @transform_4, window_bounds = array<i64: 3, 256, 256>}, {pipeline_mode = #tpu.pipeline_mode<synchronous>, transform_indices = @transform_5, window_bounds = array<i64: 1, 256>}, {pipeline_mode = #tpu.pipeline_mode<synchronous>, transform_indices = @transform_6, window_bounds = array<i64: 1, 256>}, {transform_indices = @transform_7, window_bounds = array<i64: 1, 16, 256>}]} {
    %c0 = arith.constant 0 : index
    %c0_0 = arith.constant 0 : index
    %c0_1 = arith.constant 0 : index
    %0 = vector.load %arg1[%c0, %c0_0, %c0_1] : memref<1x20x256xf32, #tpu.memory_space<vmem>>, vector<1x20x256xf32>
    %1 = vector.shape_cast %0 : vector<1x20x256xf32> to vector<20x256xf32>
    %2 = arith.truncf %1 : vector<20x256xf32> to vector<20x256xbf16>
    %3 = vector.extract_strided_slice %2 {offsets = [0, 0], sizes = [18, 256], strides = [1, 1]} : vector<20x256xbf16> to vector<18x256xbf16>
    %c0_2 = arith.constant 0 : index
    %c0_3 = arith.constant 0 : index
    %c0_4 = arith.constant 0 : index
    %4 = vector.load %arg2[%c0_2, %c0_3, %c0_4] : memref<3x256x256xbf16, #tpu.memory_space<vmem>>, vector<1x256x256xbf16>
    %5 = vector.shape_cast %4 : vector<1x256x256xbf16> to vector<256x256xbf16>
    %cst = arith.constant dense<0.000000e+00> : vector<18x256xf32>
    %6 = tpu.matmul %3, %5, %cst {dimension_numbers = #tpu.dot_dimension_numbers<[1], [0], [0], [1], [0, 0, 1, 1], [], []>} : vector<18x256xbf16>, vector<256x256xbf16>, vector<18x256xf32> -> vector<18x256xf32>
    %7 = vector.extract_strided_slice %2 {offsets = [1, 0], sizes = [18, 256], strides = [1, 1]} : vector<20x256xbf16> to vector<18x256xbf16>
    %c1 = arith.constant 1 : index
    %c0_5 = arith.constant 0 : index
    %c0_6 = arith.constant 0 : index
    %8 = vector.load %arg2[%c1, %c0_5, %c0_6] : memref<3x256x256xbf16, #tpu.memory_space<vmem>>, vector<1x256x256xbf16>
    %9 = vector.shape_cast %8 : vector<1x256x256xbf16> to vector<256x256xbf16>
    %cst_7 = arith.constant dense<0.000000e+00> : vector<18x256xf32>
    %10 = tpu.matmul %7, %9, %cst_7 {dimension_numbers = #tpu.dot_dimension_numbers<[1], [0], [0], [1], [0, 0, 1, 1], [], []>} : vector<18x256xbf16>, vector<256x256xbf16>, vector<18x256xf32> -> vector<18x256xf32>
    %11 = arith.addf %6, %10 : vector<18x256xf32>
    %12 = vector.extract_strided_slice %2 {offsets = [2, 0], sizes = [18, 256], strides = [1, 1]} : vector<20x256xbf16> to vector<18x256xbf16>
    %c2 = arith.constant 2 : index
    %c0_8 = arith.constant 0 : index
    %c0_9 = arith.constant 0 : index
    %13 = vector.load %arg2[%c2, %c0_8, %c0_9] : memref<3x256x256xbf16, #tpu.memory_space<vmem>>, vector<1x256x256xbf16>
    %14 = vector.shape_cast %13 : vector<1x256x256xbf16> to vector<256x256xbf16>
    %cst_10 = arith.constant dense<0.000000e+00> : vector<18x256xf32>
    %15 = tpu.matmul %12, %14, %cst_10 {dimension_numbers = #tpu.dot_dimension_numbers<[1], [0], [0], [1], [0, 0, 1, 1], [], []>} : vector<18x256xbf16>, vector<256x256xbf16>, vector<18x256xf32> -> vector<18x256xf32>
    %16 = arith.addf %11, %15 : vector<18x256xf32>
    %c0_11 = arith.constant 0 : index
    %c0_12 = arith.constant 0 : index
    %17 = vector.load %arg3[%c0_11, %c0_12] : memref<1x256xf32, #tpu.memory_space<vmem>>, vector<1x256xf32>
    %18 = vector.broadcast %17 : vector<1x256xf32> to vector<18x256xf32>
    %19 = arith.mulf %16, %18 : vector<18x256xf32>
    %c0_13 = arith.constant 0 : index
    %c0_14 = arith.constant 0 : index
    %20 = vector.load %arg4[%c0_13, %c0_14] : memref<1x256xf32, #tpu.memory_space<vmem>>, vector<1x256xf32>
    %21 = vector.broadcast %20 : vector<1x256xf32> to vector<18x256xf32>
    %22 = arith.addf %19, %21 : vector<18x256xf32>
    %cst_15 = arith.constant 0.000000e+00 : f32
    %23 = vector.broadcast %cst_15 : f32 to vector<18x256xf32>
    %24 = arith.cmpf oge, %22, %23 : vector<18x256xf32>
    %cst_16 = arith.constant 1.000000e-01 : f32
    %25 = vector.broadcast %cst_16 : f32 to vector<18x256xf32>
    %26 = arith.mulf %25, %22 : vector<18x256xf32>
    %27 = arith.select %24, %22, %26 : vector<18x256xi1>, vector<18x256xf32>
    %28 = tpu.iota {dimensions = array<i32: 0>} : vector<18x256xi32>
    %29 = tpu.iota {dimensions = array<i32: 1>} : vector<18x256xi32>
    %c1_i32 = arith.constant 1 : i32
    %30 = vector.broadcast %c1_i32 : i32 to vector<18x256xi32>
    %31 = arith.cmpi sge, %28, %30 : vector<18x256xi32>
    %c17_i32 = arith.constant 17 : i32
    %32 = vector.broadcast %c17_i32 : i32 to vector<18x256xi32>
    %33 = arith.cmpi slt, %28, %32 : vector<18x256xi32>
    %34 = arith.andi %31, %33 : vector<18x256xi1>
    %c16_i32 = arith.constant 16 : i32
    %35 = vector.broadcast %c16_i32 : i32 to vector<18x256xi32>
    %36 = arith.cmpi sge, %29, %35 : vector<18x256xi32>
    %37 = arith.andi %34, %36 : vector<18x256xi1>
    %c144_i32 = arith.constant 144 : i32
    %38 = vector.broadcast %c144_i32 : i32 to vector<18x256xi32>
    %39 = arith.cmpi slt, %29, %38 : vector<18x256xi32>
    %40 = arith.andi %37, %39 : vector<18x256xi1>
    %cst_17 = arith.constant 0.000000e+00 : f32
    %41 = vector.broadcast %cst_17 : f32 to vector<18x256xf32>
    %42 = arith.select %40, %27, %41 : vector<18x256xi1>, vector<18x256xf32>
    %43 = arith.truncf %42 : vector<18x256xf32> to vector<18x256xbf16>
    %44 = vector.extract_strided_slice %43 {offsets = [0, 0], sizes = [16, 256], strides = [1, 1]} : vector<18x256xbf16> to vector<16x256xbf16>
    %c0_18 = arith.constant 0 : index
    %c0_19 = arith.constant 0 : index
    %c0_20 = arith.constant 0 : index
    %45 = vector.load %arg5[%c0_18, %c0_19, %c0_20] : memref<3x256x256xbf16, #tpu.memory_space<vmem>>, vector<1x256x256xbf16>
    %46 = vector.shape_cast %45 : vector<1x256x256xbf16> to vector<256x256xbf16>
    %cst_21 = arith.constant dense<0.000000e+00> : vector<16x256xf32>
    %47 = tpu.matmul %44, %46, %cst_21 {dimension_numbers = #tpu.dot_dimension_numbers<[1], [0], [0], [1], [0, 0, 1, 1], [], []>} : vector<16x256xbf16>, vector<256x256xbf16>, vector<16x256xf32> -> vector<16x256xf32>
    %48 = vector.extract_strided_slice %43 {offsets = [1, 0], sizes = [16, 256], strides = [1, 1]} : vector<18x256xbf16> to vector<16x256xbf16>
    %c1_22 = arith.constant 1 : index
    %c0_23 = arith.constant 0 : index
    %c0_24 = arith.constant 0 : index
    %49 = vector.load %arg5[%c1_22, %c0_23, %c0_24] : memref<3x256x256xbf16, #tpu.memory_space<vmem>>, vector<1x256x256xbf16>
    %50 = vector.shape_cast %49 : vector<1x256x256xbf16> to vector<256x256xbf16>
    %cst_25 = arith.constant dense<0.000000e+00> : vector<16x256xf32>
    %51 = tpu.matmul %48, %50, %cst_25 {dimension_numbers = #tpu.dot_dimension_numbers<[1], [0], [0], [1], [0, 0, 1, 1], [], []>} : vector<16x256xbf16>, vector<256x256xbf16>, vector<16x256xf32> -> vector<16x256xf32>
    %52 = arith.addf %47, %51 : vector<16x256xf32>
    %53 = vector.extract_strided_slice %43 {offsets = [2, 0], sizes = [16, 256], strides = [1, 1]} : vector<18x256xbf16> to vector<16x256xbf16>
    %c2_26 = arith.constant 2 : index
    %c0_27 = arith.constant 0 : index
    %c0_28 = arith.constant 0 : index
    %54 = vector.load %arg5[%c2_26, %c0_27, %c0_28] : memref<3x256x256xbf16, #tpu.memory_space<vmem>>, vector<1x256x256xbf16>
    %55 = vector.shape_cast %54 : vector<1x256x256xbf16> to vector<256x256xbf16>
    %cst_29 = arith.constant dense<0.000000e+00> : vector<16x256xf32>
    %56 = tpu.matmul %53, %55, %cst_29 {dimension_numbers = #tpu.dot_dimension_numbers<[1], [0], [0], [1], [0, 0, 1, 1], [], []>} : vector<16x256xbf16>, vector<256x256xbf16>, vector<16x256xf32> -> vector<16x256xf32>
    %57 = arith.addf %52, %56 : vector<16x256xf32>
    %c0_30 = arith.constant 0 : index
    %c0_31 = arith.constant 0 : index
    %58 = vector.load %arg6[%c0_30, %c0_31] : memref<1x256xf32, #tpu.memory_space<vmem>>, vector<1x256xf32>
    %59 = vector.broadcast %58 : vector<1x256xf32> to vector<16x256xf32>
    %60 = arith.mulf %57, %59 : vector<16x256xf32>
    %c0_32 = arith.constant 0 : index
    %c0_33 = arith.constant 0 : index
    %61 = vector.load %arg7[%c0_32, %c0_33] : memref<1x256xf32, #tpu.memory_space<vmem>>, vector<1x256xf32>
    %62 = vector.broadcast %61 : vector<1x256xf32> to vector<16x256xf32>
    %63 = arith.addf %60, %62 : vector<16x256xf32>
    %64 = vector.extract_strided_slice %1 {offsets = [2, 0], sizes = [16, 256], strides = [1, 1]} : vector<20x256xf32> to vector<16x256xf32>
    %65 = arith.addf %63, %64 : vector<16x256xf32>
    %cst_34 = arith.constant 0.000000e+00 : f32
    %66 = vector.broadcast %cst_34 : f32 to vector<16x256xf32>
    %67 = arith.cmpf oge, %65, %66 : vector<16x256xf32>
    %cst_35 = arith.constant 1.000000e-01 : f32
    %68 = vector.broadcast %cst_35 : f32 to vector<16x256xf32>
    %69 = arith.mulf %68, %65 : vector<16x256xf32>
    %70 = arith.select %67, %65, %69 : vector<16x256xi1>, vector<16x256xf32>
    %c0_36 = arith.constant 0 : index
    %c0_37 = arith.constant 0 : index
    %c0_38 = arith.constant 0 : index
    %71 = vector.load %arg8[%c0_36, %c0_37, %c0_38] : memref<1x16x256xf32, #tpu.memory_space<vmem>>, vector<1x16x256xf32>
    %72 = vector.shape_cast %71 : vector<1x16x256xf32> to vector<16x256xf32>
    %73 = vector.shape_cast %70 : vector<16x256xf32> to vector<1x16x256xf32>
    tpu.vector_store %arg8[%c0_36, %c0_37, %c0_38], %73 {strides = array<i32>} : memref<1x16x256xf32, #tpu.memory_space<vmem>>, vector<1x16x256xf32>,
    return
  }
  func.func @transform_0(%arg0: i32) -> (i32, i32, i32) {
    %c0_i32 = arith.constant 0 : i32
    %c0_i32_0 = arith.constant 0 : i32
    %c0_i32_1 = arith.constant 0 : i32
    return %arg0, %c0_i32, %c0_i32_0 : i32, i32, i32
  }
  func.func @transform_1(%arg0: i32) -> (i32, i32, i32) {
    %c0_i32 = arith.constant 0 : i32
    %c0_i32_0 = arith.constant 0 : i32
    %c0_i32_1 = arith.constant 0 : i32
    %c0_i32_2 = arith.constant 0 : i32
    return %c0_i32, %c0_i32_0, %c0_i32_1 : i32, i32, i32
  }
  func.func @transform_2(%arg0: i32) -> (i32, i32) {
    %c0_i32 = arith.constant 0 : i32
    %c0_i32_0 = arith.constant 0 : i32
    %c0_i32_1 = arith.constant 0 : i32
    return %c0_i32, %c0_i32_0 : i32, i32
  }
  func.func @transform_3(%arg0: i32) -> (i32, i32) {
    %c0_i32 = arith.constant 0 : i32
    %c0_i32_0 = arith.constant 0 : i32
    %c0_i32_1 = arith.constant 0 : i32
    return %c0_i32, %c0_i32_0 : i32, i32
  }
  func.func @transform_4(%arg0: i32) -> (i32, i32, i32) {
    %c0_i32 = arith.constant 0 : i32
    %c0_i32_0 = arith.constant 0 : i32
    %c0_i32_1 = arith.constant 0 : i32
    %c0_i32_2 = arith.constant 0 : i32
    return %c0_i32, %c0_i32_0, %c0_i32_1 : i32, i32, i32
  }
  func.func @transform_5(%arg0: i32) -> (i32, i32) {
    %c0_i32 = arith.constant 0 : i32
    %c0_i32_0 = arith.constant 0 : i32
    %c0_i32_1 = arith.constant 0 : i32
    return %c0_i32, %c0_i32_0 : i32, i32
  }
  func.func @transform_6(%arg0: i32) -> (i32, i32) {
    %c0_i32 = arith.constant 0 : i32
    %c0_i32_0 = arith.constant 0 : i32
    %c0_i32_1 = arith.constant 0 : i32
    return %c0_i32, %c0_i32_0 : i32, i32
  }
  func.func @transform_7(%arg0: i32) -> (i32, i32, i32) {
    %c0_i32 = arith.constant 0 : i32
    %c0_i32_0 = arith.constant 0 : i32
    %c0_i32_1 = arith.constant 0 : i32
    return %arg0, %c0_i32, %c0_i32_0 : i32, i32, i32
  }
}

</mosaic_0001>

<llo_original>
// kernel: tpu_custom_call.1
$region0: #{tpu_custom_call.1}
  #allocation0 [shape = 'u32[]', space=smem, size = 0x4, offset = 0x4, fixed_abs, tag = 'smem constant byte address 0x4 - core index']
  #allocation1 [shape = 'u32[144,128]{1,0:T(1,128)}', space=vmem, size = 0x12000, scoped, tag = 'internal scratch']
  %s0 = inlined_call_operand.vmem [shape: f32[2,20,256], index: 0, kind: input, shape index: {}]
  %s1 = inlined_call_operand.hbm [shape: bf16[3,256,256], index: 1, kind: input, shape index: {}]
  %s2 = inlined_call_operand.vmem [shape: f32[1,256], index: 2, kind: input, shape index: {}]
  %s3 = inlined_call_operand.vmem [shape: f32[1,256], index: 3, kind: input, shape index: {}]
  %s4 = inlined_call_operand.hbm [shape: bf16[3,256,256], index: 4, kind: input, shape index: {}]
  %s5 = inlined_call_operand.vmem [shape: f32[1,256], index: 5, kind: input, shape index: {}]
  %s6 = inlined_call_operand.vmem [shape: f32[1,256], index: 6, kind: input, shape index: {}]
  %s7 = inlined_call_operand.hbm [shape: f32[2,16,256], index: 7, kind: output, shape index: {}]
  %s8 = sld [smem:[#allocation0]]
  $region69: #{tpu_custom_call.1} parent=0
    _
  %s10 = ssub.s32 1, %s8
  %s11 = scalar_select 0, %s10, %s8
  $region1: #{tpu_custom_call.1} parent=0
    #allocation2 [shape = 'u8[393216]{0}', space=vmem, size = 0x60000, scoped, tag = 'input window, operand 1, single buffered']
    #allocation3 [shape = 's32[2]{0}', space=sflag, size = 0x8, scoped, tag = 'scoped memory for tpu_custom_call.1']
    #allocation4 [shape = 's32[2]{0}', space=sflag, size = 0x8, scoped, tag = 'scoped memory for tpu_custom_call.1']
    #allocation5 [shape = 'u8[393216]{0}', space=vmem, size = 0x60000, scoped, tag = 'input window, operand 4, single buffered']
    #allocation6 [shape = 's32[1]{0}', space=sflag, size = 0x4, scoped, tag = 'scoped memory for tpu_custom_call.1']
    #allocation7 [shape = 'u8[32768]{0}', space=vmem, size = 0x8000, scoped, tag = 'output window, operand 0']
    %12 = vsyncpa [#allocation3], 0
    %13 = vsyncpa [#allocation6], 0
    %14 = vsyncpa [#allocation4], 0
    %s15 = scalar_lea.sflag [#allocation4], 1
    %16 = vsyncpa %s15, 0
    loop: start=0, step=1, limit=4
    $region2: #{tpu_custom_call.1} parent=1 // loop_pre_header
      _
    $region3: #{tpu_custom_call.1} parent=1 // loop_header
      %s18 = sphi 0, %s22
      %p19 = scmp.ge.s32.totalorder %s18, 4
      %s28 = sphi 0, %s30
      %s31 = sphi 0, %s28
      %s32 = sphi 0, %s31
      %s48 = sphi 0, %s32
      %s52 = sphi 0, %s52
      %s54 = sphi 0, %s52
      %s55 = sphi 0, %s54
      %s69 = sphi 0, %s55
      %s73 = sphi 0, %s73
      %s75 = sphi 0, %s73
      %s76 = sphi 0, %s75
      %s90 = sphi 0, %s76
      %s94 = sphi 0, %s94
      %s96 = sphi 0, %s94
      %s97 = sphi 0, %s96
      %s111 = sphi 0, %s97
      %s115 = sphi 0, %s115
      %s117 = sphi 0, %s115
      %s118 = sphi 0, %s117
      %s132 = sphi 0, %s118
      %s136 = sphi 0, %s136
      %s138 = sphi 0, %s136
      %s139 = sphi 0, %s138
      %s153 = sphi 0, %s139
      %s157 = sphi 0, %s157
      %s159 = sphi 0, %s157
      %s160 = sphi 0, %s159
      %s174 = sphi 0, %s160
      %s180 = sphi 0, %s182
      %s183 = sphi 0, %s180
      %s184 = sphi 0, %s183
      %s200 = sphi 0, %s184
    $region4: #{tpu_custom_call.1} parent=1 // loop_header_branch
      %21 = sbr.rel (%p19) target = $region8
    $region5: #{tpu_custom_call.1} parent=1 // loop_body
      %s23 = ssub.s32 %s18, 1
      %s24 = ssub.s32 %s18, 2
      %s25 = sadd.s32 %s18, 1
      %s26 = ssub.s32 %s18, %s25
      %p27 = scmp.eq.s32.totalorder %s26, 0
      %s29 = sadd.s32 %s28, 1
      %s30 = scalar_select %p27, %s28, %s29
      %p33 = pneg %p27
      %p34 = scmp.eq.s32.totalorder %s18, 1
      %p35 = por %p33, %p34
      %p36 = scmp.ne.s32.totalorder %s28, %s31
      %p37 = scmp.eq.s32.totalorder %s18, 0
      %p38 = por %p36, %p37
      %p39 = scmp.ne.s32.totalorder %s28, %s31
      %p40 = scmp.eq.s32.totalorder %s23, 1
      %p41 = por %p39, %p40
      %p42 = scmp.ne.s32.totalorder %s31, %s32
      %p43 = scmp.eq.s32.totalorder %s23, 0
      %p44 = por %p42, %p43
      %p45 = scmp.ne.s32.totalorder %s31, %s32
      %p46 = scmp.eq.s32.totalorder %s24, 1
      %p47 = por %p45, %p46
      %p49 = scmp.ne.s32.totalorder %s32, %s48
      %p50 = scmp.eq.s32.totalorder %s24, 0
      %p51 = por %p49, %p50
      %s53 = sadd.s32 %s52, 1
      %p56 = scmp.eq.s32.totalorder %s18, 1
      %p57 = scmp.ne.s32.totalorder %s52, %s54
      %p58 = scmp.eq.s32.totalorder %s18, 0
      %p59 = por %p57, %p58
      %p60 = scmp.ne.s32.totalorder %s52, %s54
      %p61 = scmp.eq.s32.totalorder %s23, 1
      %p62 = por %p60, %p61
      %p63 = scmp.ne.s32.totalorder %s54, %s55
      %p64 = scmp.eq.s32.totalorder %s23, 0
      %p65 = por %p63, %p64
      %p66 = scmp.ne.s32.totalorder %s54, %s55
      %p67 = scmp.eq.s32.totalorder %s24, 1
      %p68 = por %p66, %p67
      %p70 = scmp.ne.s32.totalorder %s55, %s69
      %p71 = scmp.eq.s32.totalorder %s24, 0
      %p72 = por %p70, %p71
      %s74 = sadd.s32 %s73, 1
      %p77 = scmp.eq.s32.totalorder %s18, 1
      %p78 = scmp.ne.s32.totalorder %s73, %s75
      %p79 = scmp.eq.s32.totalorder %s18, 0
      %p80 = por %p78, %p79
      %p81 = scmp.ne.s32.totalorder %s73, %s75
      %p82 = scmp.eq.s32.totalorder %s23, 1
      %p83 = por %p81, %p82
      %p84 = scmp.ne.s32.totalorder %s75, %s76
      %p85 = scmp.eq.s32.totalorder %s23, 0
      %p86 = por %p84, %p85
      %p87 = scmp.ne.s32.totalorder %s75, %s76
      %p88 = scmp.eq.s32.totalorder %s24, 1
      %p89 = por %p87, %p88
      %p91 = scmp.ne.s32.totalorder %s76, %s90
      %p92 = scmp.eq.s32.totalorder %s24, 0
      %p93 = por %p91, %p92
      %s95 = sadd.s32 %s94, 1
      %p98 = scmp.eq.s32.totalorder %s18, 1
      %p99 = scmp.ne.s32.totalorder %s94, %s96
      %p100 = scmp.eq.s32.totalorder %s18, 0
      %p101 = por %p99, %p100
      %p102 = scmp.ne.s32.totalorder %s94, %s96
      %p103 = scmp.eq.s32.totalorder %s23, 1
      %p104 = por %p102, %p103
      %p105 = scmp.ne.s32.totalorder %s96, %s97
      %p106 = scmp.eq.s32.totalorder %s23, 0
      %p107 = por %p105, %p106
      %p108 = scmp.ne.s32.totalorder %s96, %s97
      %p109 = scmp.eq.s32.totalorder %s24, 1
      %p110 = por %p108, %p109
      %p112 = scmp.ne.s32.totalorder %s97, %s111
      %p113 = scmp.eq.s32.totalorder %s24, 0
      %p114 = por %p112, %p113
      %s116 = sadd.s32 %s115, 1
      %p119 = scmp.eq.s32.totalorder %s18, 1
      %p120 = scmp.ne.s32.totalorder %s115, %s117
      %p121 = scmp.eq.s32.totalorder %s18, 0
      %p122 = por %p120, %p121
      %p123 = scmp.ne.s32.totalorder %s115, %s117
      %p124 = scmp.eq.s32.totalorder %s23, 1
      %p125 = por %p123, %p124
      %p126 = scmp.ne.s32.totalorder %s117, %s118
      %p127 = scmp.eq.s32.totalorder %s23, 0
      %p128 = por %p126, %p127
      %p129 = scmp.ne.s32.totalorder %s117, %s118
      %p130 = scmp.eq.s32.totalorder %s24, 1
      %p131 = por %p129, %p130
      %p133 = scmp.ne.s32.totalorder %s118, %s132
      %p134 = scmp.eq.s32.totalorder %s24, 0
      %p135 = por %p133, %p134
      %s137 = sadd.s32 %s136, 1
      %p140 = scmp.eq.s32.totalorder %s18, 1
      %p141 = scmp.ne.s32.totalorder %s136, %s138
      %p142 = scmp.eq.s32.totalorder %s18, 0
      %p143 = por %p141, %p142
      %p144 = scmp.ne.s32.totalorder %s136, %s138
      %p145 = scmp.eq.s32.totalorder %s23, 1
      %p146 = por %p144, %p145
      %p147 = scmp.ne.s32.totalorder %s138, %s139
      %p148 = scmp.eq.s32.totalorder %s23, 0
      %p149 = por %p147, %p148
      %p150 = scmp.ne.s32.totalorder %s138, %s139
      %p151 = scmp.eq.s32.totalorder %s24, 1
      %p152 = por %p150, %p151
      %p154 = scmp.ne.s32.totalorder %s139, %s153
      %p155 = scmp.eq.s32.totalorder %s24, 0
      %p156 = por %p154, %p155
      %s158 = sadd.s32 %s157, 1
      %p161 = scmp.eq.s32.totalorder %s18, 1
      %p162 = scmp.ne.s32.totalorder %s157, %s159
      %p163 = scmp.eq.s32.totalorder %s18, 0
      %p164 = por %p162, %p163
      %p165 = scmp.ne.s32.totalorder %s157, %s159
      %p166 = scmp.eq.s32.totalorder %s23, 1
      %p167 = por %p165, %p166
      %p168 = scmp.ne.s32.totalorder %s159, %s160
      %p169 = scmp.eq.s32.totalorder %s23, 0
      %p170 = por %p168, %p169
      %p171 = scmp.ne.s32.totalorder %s159, %s160
      %p172 = scmp.eq.s32.totalorder %s24, 1
      %p173 = por %p171, %p172
      %p175 = scmp.ne.s32.totalorder %s160, %s174
      %p176 = scmp.eq.s32.totalorder %s24, 0
      %p177 = por %p175, %p176
      %s178 = ssub.s32 %s18, %s25
      %p179 = scmp.eq.s32.totalorder %s178, 0
      %s181 = sadd.s32 %s180, 1
      %s182 = scalar_select %p179, %s180, %s181
      %p185 = pneg %p179
      %p186 = scmp.eq.s32.totalorder %s18, 1
      %p187 = por %p185, %p186
      %p188 = scmp.ne.s32.totalorder %s180, %s183
      %p189 = scmp.eq.s32.totalorder %s18, 0
      %p190 = por %p188, %p189
      %p191 = scmp.ne.s32.totalorder %s180, %s183
      %p192 = scmp.eq.s32.totalorder %s23, 1
      %p193 = por %p191, %p192
      %p194 = scmp.ne.s32.totalorder %s183, %s184
      %p195 = scmp.eq.s32.totalorder %s23, 0
      %p196 = por %p194, %p195
      %p197 = scmp.ne.s32.totalorder %s183, %s184
      %p198 = scmp.eq.s32.totalorder %s24, 1
      %p199 = por %p197, %p198
      %p201 = scmp.ne.s32.totalorder %s184, %s200
      %p202 = scmp.eq.s32.totalorder %s24, 0
      %p203 = por %p201, %p202
      %p204 = scmp.le.s32.totalorder 1, %s18
      %p205 = scmp.lt.s32.totalorder %s18, 3
      %p206 = pnand %p204, %p205
      %p207 = pneg %p206
      // Predicated region
      $region9: #{tpu_custom_call.1} parent=5 // pred_check
        _
      $region10: #{tpu_custom_call.1} parent=5 // pred_check_branch
        %209 = sbr.rel (%p206) target = $region12
      $region11: #{tpu_custom_call.1} parent=5 // pred_region
        %s210 = ssub.s32 %s18, 1
        // Predicated region
        $region13: #{tpu_custom_call.1} parent=11 // pred_check
          %p211 = pneg %p65
        $region14: #{tpu_custom_call.1} parent=11 // pred_check_branch
          %213 = sbr.rel (%p211) target = $region16
        $region15: #{tpu_custom_call.1} parent=11 // pred_region
          %s215 = ssub.s32 12288, 12288
          %216 = vsyncadd [#allocation3], %s215
          %s217 = sshll.u32 [#allocation2], 4
          %s218 = int_to_ptr.vmem [resolvable:$true] %s217
          %223 = dma.hbm_to_vmem [thread:$0]  %s1, 12288, %s218, [#allocation3], 128, 128, 8
        $region16: #{tpu_custom_call.1} parent=11 // pred_fallthru
          _
        // Predicated region
        $region17: #{tpu_custom_call.1} parent=11 // pred_check
          %p224 = pneg %p86
        $region18: #{tpu_custom_call.1} parent=11 // pred_check_branch
          %226 = sbr.rel (%p224) target = $region20
        $region19: #{tpu_custom_call.1} parent=11 // pred_region
          _
        $region20: #{tpu_custom_call.1} parent=11 // pred_fallthru
          _
        // Predicated region
        $region21: #{tpu_custom_call.1} parent=11 // pred_check
          %p227 = pneg %p107
        $region22: #{tpu_custom_call.1} parent=11 // pred_check_branch
          %229 = sbr.rel (%p227) target = $region24
        $region23: #{tpu_custom_call.1} parent=11 // pred_region
          _
        $region24: #{tpu_custom_call.1} parent=11 // pred_fallthru
          _
        // Predicated region
        $region25: #{tpu_custom_call.1} parent=11 // pred_check
          %p230 = pneg %p128
        $region26: #{tpu_custom_call.1} parent=11 // pred_check_branch
          %232 = sbr.rel (%p230) target = $region28
        $region27: #{tpu_custom_call.1} parent=11 // pred_region
          %s234 = ssub.s32 12288, 12288
          %235 = vsyncadd [#allocation6], %s234
          %s236 = sshll.u32 [#allocation5], 4
          %s237 = int_to_ptr.vmem [resolvable:$true] %s236
          %242 = dma.hbm_to_vmem [thread:$0]  %s4, 12288, %s237, [#allocation6], 128, 128, 8
        $region28: #{tpu_custom_call.1} parent=11 // pred_fallthru
          _
        // Predicated region
        $region29: #{tpu_custom_call.1} parent=11 // pred_check
          %p243 = pneg %p149
        $region30: #{tpu_custom_call.1} parent=11 // pred_check_branch
          %245 = sbr.rel (%p243) target = $region32
        $region31: #{tpu_custom_call.1} parent=11 // pred_region
          _
        $region32: #{tpu_custom_call.1} parent=11 // pred_fallthru
          _
        // Predicated region
        $region33: #{tpu_custom_call.1} parent=11 // pred_check
          %p246 = pneg %p170
        $region34: #{tpu_custom_call.1} parent=11 // pred_check_branch
          %248 = sbr.rel (%p246) target = $region36
        $region35: #{tpu_custom_call.1} parent=11 // pred_region
          _
        $region36: #{tpu_custom_call.1} parent=11 // pred_fallthru
          _
      $region12: #{tpu_custom_call.1} parent=5 // pred_fallthru
        _
      %p249 = scmp.lt.s32.totalorder %s18, 2
      // Predicated region
      $region37: #{tpu_custom_call.1} parent=5 // pred_check
        %p250 = pneg %p249
      $region38: #{tpu_custom_call.1} parent=5 // pred_check_branch
        %252 = sbr.rel (%p250) target = $region40
      $region39: #{tpu_custom_call.1} parent=5 // pred_region
        // Predicated region
        $region41: #{tpu_custom_call.1} parent=39 // pred_check
          %p253 = pneg %p38
        $region42: #{tpu_custom_call.1} parent=39 // pred_check_branch
          %255 = sbr.rel (%p253) target = $region44
        $region43: #{tpu_custom_call.1} parent=39 // pred_region
          %p256 = scmp.lt.s32.totalorder %s18, 1
          %s257 = scalar_select %p256, %s18, 1
          %s258 = smul.addr %s257, 6
          %s259 = smul.addr %s258, 8
          %s260 = scalar_lea.vmem %s0, %s259
        $region44: #{tpu_custom_call.1} parent=39 // pred_fallthru
          _
      $region40: #{tpu_custom_call.1} parent=5 // pred_fallthru
        _
      %p261 = scmp.le.s32.totalorder 1, %s18
      %p262 = scmp.lt.s32.totalorder %s18, 3
      %p263 = pnand %p261, %p262
      %p264 = pneg %p263
      // Predicated region
      $region45: #{tpu_custom_call.1} parent=5 // pred_check
        _
      $region46: #{tpu_custom_call.1} parent=5 // pred_check_branch
        %266 = sbr.rel (%p263) target = $region48
      $region47: #{tpu_custom_call.1} parent=5 // pred_region
        %s267 = ssub.s32 %s18, 1
        // Predicated region
        $region49: #{tpu_custom_call.1} parent=47 // pred_check
          %p268 = pneg %p65
        $region50: #{tpu_custom_call.1} parent=47 // pred_check_branch
          %270 = sbr.rel (%p268) target = $region52
        $region51: #{tpu_custom_call.1} parent=47 // pred_region
          %271 = dma.done [#allocation3], 12288
        $region52: #{tpu_custom_call.1} parent=47 // pred_fallthru
          _
        // Predicated region
        $region53: #{tpu_custom_call.1} parent=47 // pred_check
          %p272 = pneg %p128
        $region54: #{tpu_custom_call.1} parent=47 // pred_check_branch
          %274 = sbr.rel (%p272) target = $region56
        $region55: #{tpu_custom_call.1} parent=47 // pred_region
          %275 = dma.done [#allocation6], 12288
        $region56: #{tpu_custom_call.1} parent=47 // pred_fallthru
          _
        %p276 = scmp.lt.s32.totalorder %s23, 1
        %s277 = scalar_select %p276, %s23, 1
        %s278 = smul.addr %s277, 6
        %s279 = smul.addr %s278, 8
        %s280 = scalar_lea.vmem %s0, %s279
        %p281 = pneg %p44
        %p282 = pneg %p41
        %p283 = pneg %p65
        %p284 = pneg %p62
        %p285 = pneg %p86
        %p286 = pneg %p83
        %p287 = pneg %p107
        %p288 = pneg %p104
        %p289 = pneg %p128
        %p290 = pneg %p125
        %p291 = pneg %p149
        %p292 = pneg %p146
        %p293 = pneg %p170
        %p294 = pneg %p167
        %p295 = pneg %p196
        %p296 = pneg %p193
        %s297 = sand.u32 %s183, 1
        %s298 = scalar_lea.sflag [#allocation4], %s297
        %s299 = sand.u32 %s183, 1
        %s300 = smul.addr %s299, 32
        %s301 = scalar_lea.vmem [#allocation7], %s300
        %p302 = scmp.lt.s32.totalorder %s23, 1
        %s303 = scalar_select %p302, %s23, 1
        %s304 = smul.addr %s303, 6
        %s305 = smul.addr %s304, 8
        %s306 = scalar_lea.vmem %s0, %s305
        %v307 = vld [vmem:[%s306] sm:$0xff]
        %v308 = vld [vmem:[%s306 + $0x8] sm:$0xff]
        %v309 = vld [vmem:[%s306 + $0x10] sm:$0xff]
        %v310 = vld [vmem:[%s306 + $0x18] sm:$0xff]
        %v311 = vld [vmem:[%s306 + $0x20] sm:$0xf]
        %v312 = vld [vmem:[%s306 + $0x28] sm:$0xf]
        %v313 = vpack.c.bf16 %v309, %v307
        %v314 = vpack.c.bf16 %v310, %v308
        %v315 = vpack.c.bf16 %v311, %v311
        %v316 = vpack.c.bf16 %v312, %v312
        %v317 = vld [vmem:[#allocation2] sm:$0xff]
        %v318 = vld [vmem:[#allocation2 + $0x8] sm:$0xff]
        %v319 = vld [vmem:[#allocation2 + $0x10] sm:$0xff]
        %v320 = vld [vmem:[#allocation2 + $0x18] sm:$0xff]
        %v321 = vld [vmem:[#allocation2 + $0x20] sm:$0xff]
        %v322 = vld [vmem:[#allocation2 + $0x28] sm:$0xff]
        %v323 = vld [vmem:[#allocation2 + $0x30] sm:$0xff]
        %v324 = vld [vmem:[#allocation2 + $0x38] sm:$0xff]
        %v325 = vld [vmem:[#allocation2 + $0x40] sm:$0xff]
        %v326 = vld [vmem:[#allocation2 + $0x48] sm:$0xff]
        %v327 = vld [vmem:[#allocation2 + $0x50] sm:$0xff]
        %v328 = vld [vmem:[#allocation2 + $0x58] sm:$0xff]
        %v329 = vld [vmem:[#allocation2 + $0x60] sm:$0xff]
        %v330 = vld [vmem:[#allocation2 + $0x68] sm:$0xff]
        %v331 = vld [vmem:[#allocation2 + $0x70] sm:$0xff]
        %v332 = vld [vmem:[#allocation2 + $0x78] sm:$0xff]
        %v333 = vld [vmem:[#allocation2 + $0x80] sm:$0xff]
        %v334 = vld [vmem:[#allocation2 + $0x88] sm:$0xff]
        %v335 = vld [vmem:[#allocation2 + $0x90] sm:$0xff]
        %v336 = vld [vmem:[#allocation2 + $0x98] sm:$0xff]
        %v337 = vld [vmem:[#allocation2 + $0xa0] sm:$0xff]
        %v338 = vld [vmem:[#allocation2 + $0xa8] sm:$0xff]
        %v339 = vld [vmem:[#allocation2 + $0xb0] sm:$0xff]
        %v340 = vld [vmem:[#allocation2 + $0xb8] sm:$0xff]
        %v341 = vld [vmem:[#allocation2 + $0xc0] sm:$0xff]
        %v342 = vld [vmem:[#allocation2 + $0xc8] sm:$0xff]
        %v343 = vld [vmem:[#allocation2 + $0xd0] sm:$0xff]
        %v344 = vld [vmem:[#allocation2 + $0xd8] sm:$0xff]
        %v345 = vld [vmem:[#allocation2 + $0xe0] sm:$0xff]
        %v346 = vld [vmem:[#allocation2 + $0xe8] sm:$0xff]
        %v347 = vld [vmem:[#allocation2 + $0xf0] sm:$0xff]
        %v348 = vld [vmem:[#allocation2 + $0xf8] sm:$0xff]
        %s349 = scalar_lea.vmem [#allocation2], 256
        %v350 = vld [vmem:[%s349] sm:$0xff]
        %v351 = vld [vmem:[%s349 + $0x8] sm:$0xff]
        %v352 = vld [vmem:[%s349 + $0x10] sm:$0xff]
        %v353 = vld [vmem:[%s349 + $0x18] sm:$0xff]
        %v354 = vld [vmem:[%s349 + $0x20] sm:$0xff]
        %v355 = vld [vmem:[%s349 + $0x28] sm:$0xff]
        %v356 = vld [vmem:[%s349 + $0x30] sm:$0xff]
        %v357 = vld [vmem:[%s349 + $0x38] sm:$0xff]
        %v358 = vld [vmem:[%s349 + $0x40] sm:$0xff]
        %v359 = vld [vmem:[%s349 + $0x48] sm:$0xff]
        %v360 = vld [vmem:[%s349 + $0x50] sm:$0xff]
        %v361 = vld [vmem:[%s349 + $0x58] sm:$0xff]
        %v362 = vld [vmem:[%s349 + $0x60] sm:$0xff]
        %v363 = vld [vmem:[%s349 + $0x68] sm:$0xff]
        %v364 = vld [vmem:[%s349 + $0x70] sm:$0xff]
        %v365 = vld [vmem:[%s349 + $0x78] sm:$0xff]
        %v366 = vld [vmem:[%s349 + $0x80] sm:$0xff]
        %v367 = vld [vmem:[%s349 + $0x88] sm:$0xff]
        %v368 = vld [vmem:[%s349 + $0x90] sm:$0xff]
        %v369 = vld [vmem:[%s349 + $0x98] sm:$0xff]
        %v370 = vld [vmem:[%s349 + $0xa0] sm:$0xff]
        %v371 = vld [vmem:[%s349 + $0xa8] sm:$0xff]
        %v372 = vld [vmem:[%s349 + $0xb0] sm:$0xff]
        %v373 = vld [vmem:[%s349 + $0xb8] sm:$0xff]
        %v374 = vld [vmem:[%s349 + $0xc0] sm:$0xff]
        %v375 = vld [vmem:[%s349 + $0xc8] sm:$0xff]
        %v376 = vld [vmem:[%s349 + $0xd0] sm:$0xff]
        %v377 = vld [vmem:[%s349 + $0xd8] sm:$0xff]
        %v378 = vld [vmem:[%s349 + $0xe0] sm:$0xff]
        %v379 = vld [vmem:[%s349 + $0xe8] sm:$0xff]
        %v380 = vld [vmem:[%s349 + $0xf0] sm:$0xff]
        %v381 = vld [vmem:[%s349 + $0xf8] sm:$0xff]
        %vm382 = vsmask.f32 7424
        %v384 = vshrl.u32 %v313, 16
        %v386 = vshll.u32 %v313, 16
        %v388 = vrot.slane %v386, 1
        %v389 = vor.u32 %v384, %v388
        %v391 = vshll.u32 %v315, 16
        %v393 = vrot.slane %v391, 1
        %v394 = vsel %vm382, %v389, %v393
        %v396 = vshrl.u32 %v314, 16
        %v398 = vshll.u32 %v314, 16
        %v400 = vrot.slane %v398, 1
        %v401 = vor.u32 %v396, %v400
        %v403 = vshll.u32 %v316, 16
        %v405 = vrot.slane %v403, 1
        %v406 = vsel %vm382, %v401, %v405
        %v407 = vshrl.u32 %v315, 16
        %v409 = vor.u32 %v407, %v393
        %v410 = vshrl.u32 %v316, 16
        %v412 = vor.u32 %v410, %v405
        %v449 = vunpack.c.l.b16 %v350
        %v450 = vunpack.c.h.b16 %v350
        %v451 = vunpack.c.l.b16 %v351
        %v452 = vunpack.c.h.b16 %v351
        %v453 = vunpack.c.l.b16 %v352
        %v454 = vunpack.c.h.b16 %v352
        %v455 = vunpack.c.l.b16 %v353
        %v456 = vunpack.c.h.b16 %v353
        %v457 = vunpack.c.l.b16 %v354
        %v458 = vunpack.c.h.b16 %v354
        %v459 = vunpack.c.l.b16 %v355
        %v460 = vunpack.c.h.b16 %v355
        %v461 = vunpack.c.l.b16 %v356
        %v462 = vunpack.c.h.b16 %v356
        %v463 = vunpack.c.l.b16 %v357
        %v464 = vunpack.c.h.b16 %v357
        %v465 = vunpack.c.l.b16 %v358
        %v466 = vunpack.c.h.b16 %v358
        %v467 = vunpack.c.l.b16 %v359
        %v468 = vunpack.c.h.b16 %v359
        %v469 = vunpack.c.l.b16 %v360
        %v470 = vunpack.c.h.b16 %v360
        %v471 = vunpack.c.l.b16 %v361
        %v472 = vunpack.c.h.b16 %v361
        %v473 = vunpack.c.l.b16 %v362
        %v474 = vunpack.c.h.b16 %v362
        %v475 = vunpack.c.l.b16 %v363
        %v476 = vunpack.c.h.b16 %v363
        %v477 = vunpack.c.l.b16 %v364
        %v478 = vunpack.c.h.b16 %v364
        %v479 = vunpack.c.l.b16 %v365
        %v480 = vunpack.c.h.b16 %v365
        %v481 = vunpack.c.l.b16 %v366
        %v482 = vunpack.c.h.b16 %v366
        %v483 = vunpack.c.l.b16 %v367
        %v484 = vunpack.c.h.b16 %v367
        %v485 = vunpack.c.l.b16 %v368
        %v486 = vunpack.c.h.b16 %v368
        %v487 = vunpack.c.l.b16 %v369
        %v488 = vunpack.c.h.b16 %v369
        %v489 = vunpack.c.l.b16 %v370
        %v490 = vunpack.c.h.b16 %v370
        %v491 = vunpack.c.l.b16 %v371
        %v492 = vunpack.c.h.b16 %v371
        %v493 = vunpack.c.l.b16 %v372
        %v494 = vunpack.c.h.b16 %v372
        %v495 = vunpack.c.l.b16 %v373
        %v496 = vunpack.c.h.b16 %v373
        %v497 = vunpack.c.l.b16 %v374
        %v498 = vunpack.c.h.b16 %v374
        %v499 = vunpack.c.l.b16 %v375
        %v500 = vunpack.c.h.b16 %v375
        %v501 = vunpack.c.l.b16 %v376
        %v502 = vunpack.c.h.b16 %v376
        %v503 = vunpack.c.l.b16 %v377
        %v504 = vunpack.c.h.b16 %v377
        %v505 = vunpack.c.l.b16 %v378
        %v506 = vunpack.c.h.b16 %v378
        %v507 = vunpack.c.l.b16 %v379
        %v508 = vunpack.c.h.b16 %v379
        %v509 = vunpack.c.l.b16 %v380
        %v510 = vunpack.c.h.b16 %v380
        %v511 = vunpack.c.l.b16 %v381
        %v512 = vunpack.c.h.b16 %v381
        %v513 = vpack.c.b16 %v451, %v449
        %v514 = vpack.c.b16 %v452, %v450
        %v515 = vpack.c.b16 %v455, %v453
        %v516 = vpack.c.b16 %v456, %v454
        %v517 = vpack.c.b16 %v459, %v457
        %v518 = vpack.c.b16 %v460, %v458
        %v519 = vpack.c.b16 %v463, %v461
        %v520 = vpack.c.b16 %v464, %v462
        %v521 = vpack.c.b16 %v467, %v465
        %v522 = vpack.c.b16 %v468, %v466
        %v523 = vpack.c.b16 %v471, %v469
        %v524 = vpack.c.b16 %v472, %v470
        %v525 = vpack.c.b16 %v475, %v473
        %v526 = vpack.c.b16 %v476, %v474
        %v527 = vpack.c.b16 %v479, %v477
        %v528 = vpack.c.b16 %v480, %v478
        %v529 = vpack.c.b16 %v483, %v481
        %v530 = vpack.c.b16 %v484, %v482
        %v531 = vpack.c.b16 %v487, %v485
        %v532 = vpack.c.b16 %v488, %v486
        %v533 = vpack.c.b16 %v491, %v489
        %v534 = vpack.c.b16 %v492, %v490
        %v535 = vpack.c.b16 %v495, %v493
        %v536 = vpack.c.b16 %v496, %v494
        %v537 = vpack.c.b16 %v499, %v497
        %v538 = vpack.c.b16 %v500, %v498
        %v539 = vpack.c.b16 %v503, %v501
        %v540 = vpack.c.b16 %v504, %v502
        %v541 = vpack.c.b16 %v507, %v505
        %v542 = vpack.c.b16 %v508, %v506
        %v543 = vpack.c.b16 %v511, %v509
        %v544 = vpack.c.b16 %v512, %v510
        %577 = vmatprep.subr.bf16.mxu0 %v514
        %578 = vmatpush1.bf16.msra.mxu0 %v513
        %579 = vmatprep.subr.bf16.mxu0 %v516
        %580 = vmatpush1.bf16.msra.mxu0 %v515
        %581 = vmatprep.subr.bf16.mxu0 %v518
        %582 = vmatpush1.bf16.msra.mxu0 %v517
        %583 = vmatprep.subr.bf16.mxu0 %v520
        %584 = vmatpush1.bf16.msra.mxu0 %v519
        %585 = vmatprep.subr.bf16.mxu0 %v522
        %586 = vmatpush1.bf16.msra.mxu0 %v521
        %587 = vmatprep.subr.bf16.mxu0 %v524
        %588 = vmatpush1.bf16.msra.mxu0 %v523
        %589 = vmatprep.subr.bf16.mxu0 %v526
        %590 = vmatpush1.bf16.msra.mxu0 %v525
        %591 = vmatprep.subr.bf16.mxu0 %v528
        %592 = vmatpush1.bf16.msra.mxu0 %v527
        %593 = vmatprep.subr.bf16.mxu0 %v530
        %594 = vmatpush1.bf16.msra.mxu0 %v529
        %595 = vmatprep.subr.bf16.mxu0 %v532
        %596 = vmatpush1.bf16.msra.mxu0 %v531
        %597 = vmatprep.subr.bf16.mxu0 %v534
        %598 = vmatpush1.bf16.msra.mxu0 %v533
        %599 = vmatprep.subr.bf16.mxu0 %v536
        %600 = vmatpush1.bf16.msra.mxu0 %v535
        %601 = vmatprep.subr.bf16.mxu0 %v538
        %602 = vmatpush1.bf16.msra.mxu0 %v537
        %603 = vmatprep.subr.bf16.mxu0 %v540
        %604 = vmatpush1.bf16.msra.mxu0 %v539
        %605 = vmatprep.subr.bf16.mxu0 %v542
        %606 = vmatpush1.bf16.msra.mxu0 %v541
        %607 = vmatprep.subr.bf16.mxu0 %v544
        %608 = vmatpush1.bf16.msra.mxu0 %v543
        %609 = vmatprep.mubr.bf16.mxu0 %v406
        %610 = vmatmul.mubr.bf16.gmra.mrb[0].mxu0 %v394
        %v611 = vpop.f32.mrb[0].mxu0
        %v612 = vadd.f32 0.0, %v611
        %v613 = vpop.f32.mrb[0].mxu0
        %v614 = vadd.f32 0.0, %v613
        %v615 = vpop.f32.mrb[0].mxu0
        %v616 = vadd.f32 0.0, %v615
        %v617 = vpop.f32.mrb[0].mxu0
        %v618 = vadd.f32 0.0, %v617
        %619 = vmatprep.mubr.bf16.mxu0 %v412
        %620 = vmatmul.mubr.bf16.gmra.mrb[0].mxu0 %v409
        %v621 = vpop.f32.mrb[0].mxu0
        %v622 = vadd.f32 0.0, %v621
        %v623 = vpop.f32.mrb[0].mxu0
        %v624 = vadd.f32 0.0, %v623
        %v625 = vpop.f32.mrb[0].mxu0
        %v626 = vpop.f32.mrb[0].mxu0
        %627 = vdwg.mxu0
        %v660 = vunpack.c.l.b16 %v317
        %v661 = vunpack.c.h.b16 %v317
        %v662 = vunpack.c.l.b16 %v318
        %v663 = vunpack.c.h.b16 %v318
        %v664 = vunpack.c.l.b16 %v319
        %v665 = vunpack.c.h.b16 %v319
        %v666 = vunpack.c.l.b16 %v320
        %v667 = vunpack.c.h.b16 %v320
        %v668 = vunpack.c.l.b16 %v321
        %v669 = vunpack.c.h.b16 %v321
        %v670 = vunpack.c.l.b16 %v322
        %v671 = vunpack.c.h.b16 %v322
        %v672 = vunpack.c.l.b16 %v323
        %v673 = vunpack.c.h.b16 %v323
        %v674 = vunpack.c.l.b16 %v324
        %v675 = vunpack.c.h.b16 %v324
        %v676 = vunpack.c.l.b16 %v325
        %v677 = vunpack.c.h.b16 %v325
        %v678 = vunpack.c.l.b16 %v326
        %v679 = vunpack.c.h.b16 %v326
        %v680 = vunpack.c.l.b16 %v327
        %v681 = vunpack.c.h.b16 %v327
        %v682 = vunpack.c.l.b16 %v328
        %v683 = vunpack.c.h.b16 %v328
        %v684 = vunpack.c.l.b16 %v329
        %v685 = vunpack.c.h.b16 %v329
        %v686 = vunpack.c.l.b16 %v330
        %v687 = vunpack.c.h.b16 %v330
        %v688 = vunpack.c.l.b16 %v331
        %v689 = vunpack.c.h.b16 %v331
        %v690 = vunpack.c.l.b16 %v332
        %v691 = vunpack.c.h.b16 %v332
        %v692 = vunpack.c.l.b16 %v333
        %v693 = vunpack.c.h.b16 %v333
        %v694 = vunpack.c.l.b16 %v334
        %v695 = vunpack.c.h.b16 %v334
        %v696 = vunpack.c.l.b16 %v335
        %v697 = vunpack.c.h.b16 %v335
        %v698 = vunpack.c.l.b16 %v336
        %v699 = vunpack.c.h.b16 %v336
        %v700 = vunpack.c.l.b16 %v337
        %v701 = vunpack.c.h.b16 %v337
        %v702 = vunpack.c.l.b16 %v338
        %v703 = vunpack.c.h.b16 %v338
        %v704 = vunpack.c.l.b16 %v339
        %v705 = vunpack.c.h.b16 %v339
        %v706 = vunpack.c.l.b16 %v340
        %v707 = vunpack.c.h.b16 %v340
        %v708 = vunpack.c.l.b16 %v341
        %v709 = vunpack.c.h.b16 %v341
        %v710 = vunpack.c.l.b16 %v342
        %v711 = vunpack.c.h.b16 %v342
        %v712 = vunpack.c.l.b16 %v343
        %v713 = vunpack.c.h.b16 %v343
        %v714 = vunpack.c.l.b16 %v344
        %v715 = vunpack.c.h.b16 %v344
        %v716 = vunpack.c.l.b16 %v345
        %v717 = vunpack.c.h.b16 %v345
        %v718 = vunpack.c.l.b16 %v346
        %v719 = vunpack.c.h.b16 %v346
        %v720 = vunpack.c.l.b16 %v347
        %v721 = vunpack.c.h.b16 %v347
        %v722 = vunpack.c.l.b16 %v348
        %v723 = vunpack.c.h.b16 %v348
        %v724 = vpack.c.b16 %v662, %v660
        %v725 = vpack.c.b16 %v663, %v661
        %v726 = vpack.c.b16 %v666, %v664
        %v727 = vpack.c.b16 %v667, %v665
        %v728 = vpack.c.b16 %v670, %v668
        %v729 = vpack.c.b16 %v671, %v669
        %v730 = vpack.c.b16 %v674, %v672
        %v731 = vpack.c.b16 %v675, %v673
        %v732 = vpack.c.b16 %v678, %v676
        %v733 = vpack.c.b16 %v679, %v677
        %v734 = vpack.c.b16 %v682, %v680
        %v735 = vpack.c.b16 %v683, %v681
        %v736 = vpack.c.b16 %v686, %v684
        %v737 = vpack.c.b16 %v687, %v685
        %v738 = vpack.c.b16 %v690, %v688
        %v739 = vpack.c.b16 %v691, %v689
        %v740 = vpack.c.b16 %v694, %v692
        %v741 = vpack.c.b16 %v695, %v693
        %v742 = vpack.c.b16 %v698, %v696
        %v743 = vpack.c.b16 %v699, %v697
        %v744 = vpack.c.b16 %v702, %v700
        %v745 = vpack.c.b16 %v703, %v701
        %v746 = vpack.c.b16 %v706, %v704
        %v747 = vpack.c.b16 %v707, %v705
        %v748 = vpack.c.b16 %v710, %v708
        %v749 = vpack.c.b16 %v711, %v709
        %v750 = vpack.c.b16 %v714, %v712
        %v751 = vpack.c.b16 %v715, %v713
        %v752 = vpack.c.b16 %v718, %v716
        %v753 = vpack.c.b16 %v719, %v717
        %v754 = vpack.c.b16 %v722, %v720
        %v755 = vpack.c.b16 %v723, %v721
        %788 = vmatprep.subr.bf16.mxu0 %v725
        %789 = vmatpush1.bf16.msra.mxu0 %v724
        %790 = vmatprep.subr.bf16.mxu0 %v727
        %791 = vmatpush1.bf16.msra.mxu0 %v726
        %792 = vmatprep.subr.bf16.mxu0 %v729
        %793 = vmatpush1.bf16.msra.mxu0 %v728
        %794 = vmatprep.subr.bf16.mxu0 %v731
        %795 = vmatpush1.bf16.msra.mxu0 %v730
        %796 = vmatprep.subr.bf16.mxu0 %v733
        %797 = vmatpush1.bf16.msra.mxu0 %v732
        %798 = vmatprep.subr.bf16.mxu0 %v735
        %799 = vmatpush1.bf16.msra.mxu0 %v734
        %800 = vmatprep.subr.bf16.mxu0 %v737
        %801 = vmatpush1.bf16.msra.mxu0 %v736
        %802 = vmatprep.subr.bf16.mxu0 %v739
        %803 = vmatpush1.bf16.msra.mxu0 %v738
        %804 = vmatprep.subr.bf16.mxu0 %v741
        %805 = vmatpush1.bf16.msra.mxu0 %v740
        %806 = vmatprep.subr.bf16.mxu0 %v743
        %807 = vmatpush1.bf16.msra.mxu0 %v742
        %808 = vmatprep.subr.bf16.mxu0 %v745
        %809 = vmatpush1.bf16.msra.mxu0 %v744
        %810 = vmatprep.subr.bf16.mxu0 %v747
        %811 = vmatpush1.bf16.msra.mxu0 %v746
        %812 = vmatprep.subr.bf16.mxu0 %v749
        %813 = vmatpush1.bf16.msra.mxu0 %v748
        %814 = vmatprep.subr.bf16.mxu0 %v751
        %815 = vmatpush1.bf16.msra.mxu0 %v750
        %816 = vmatprep.subr.bf16.mxu0 %v753
        %817 = vmatpush1.bf16.msra.mxu0 %v752
        %818 = vmatprep.subr.bf16.mxu0 %v755
        %819 = vmatpush1.bf16.msra.mxu0 %v754
        %820 = vmatprep.mubr.bf16.mxu0 %v314
        %821 = vmatmul.mubr.bf16.gmra.mrb[0].mxu0 %v313
        %v822 = vpop.f32.mrb[0].mxu0
        %v823 = vadd.f32 %v612, %v822
        %v824 = vpop.f32.mrb[0].mxu0
        %v825 = vadd.f32 %v614, %v824
        %v826 = vpop.f32.mrb[0].mxu0
        %v827 = vadd.f32 %v616, %v826
        %v828 = vpop.f32.mrb[0].mxu0
        %v829 = vadd.f32 %v618, %v828
        %830 = vmatprep.mubr.bf16.mxu0 %v316
        %831 = vmatmul.mubr.bf16.gmra.mrb[0].mxu0 %v315
        %v832 = vpop.f32.mrb[0].mxu0
        %v833 = vadd.f32 %v622, %v832
        %v834 = vpop.f32.mrb[0].mxu0
        %v835 = vadd.f32 %v624, %v834
        %v836 = vpop.f32.mrb[0].mxu0
        %v837 = vpop.f32.mrb[0].mxu0
        %838 = vdwg.mxu0
        %s839 = scalar_lea.vmem [#allocation2], 512
        %v840 = vld [vmem:[%s839] sm:$0xff]
        %v841 = vld [vmem:[%s839 + $0x8] sm:$0xff]
        %v842 = vld [vmem:[%s839 + $0x10] sm:$0xff]
        %v843 = vld [vmem:[%s839 + $0x18] sm:$0xff]
        %v844 = vld [vmem:[%s839 + $0x20] sm:$0xff]
        %v845 = vld [vmem:[%s839 + $0x28] sm:$0xff]
        %v846 = vld [vmem:[%s839 + $0x30] sm:$0xff]
        %v847 = vld [vmem:[%s839 + $0x38] sm:$0xff]
        %v848 = vld [vmem:[%s839 + $0x40] sm:$0xff]
        %v849 = vld [vmem:[%s839 + $0x48] sm:$0xff]
        %v850 = vld [vmem:[%s839 + $0x50] sm:$0xff]
        %v851 = vld [vmem:[%s839 + $0x58] sm:$0xff]
        %v852 = vld [vmem:[%s839 + $0x60] sm:$0xff]
        %v853 = vld [vmem:[%s839 + $0x68] sm:$0xff]
        %v854 = vld [vmem:[%s839 + $0x70] sm:$0xff]
        %v855 = vld [vmem:[%s839 + $0x78] sm:$0xff]
        %v856 = vld [vmem:[%s839 + $0x80] sm:$0xff]
        %v857 = vld [vmem:[%s839 + $0x88] sm:$0xff]
        %v858 = vld [vmem:[%s839 + $0x90] sm:$0xff]
        %v859 = vld [vmem:[%s839 + $0x98] sm:$0xff]
        %v860 = vld [vmem:[%s839 + $0xa0] sm:$0xff]
        %v861 = vld [vmem:[%s839 + $0xa8] sm:$0xff]
        %v862 = vld [vmem:[%s839 + $0xb0] sm:$0xff]
        %v863 = vld [vmem:[%s839 + $0xb8] sm:$0xff]
        %v864 = vld [vmem:[%s839 + $0xc0] sm:$0xff]
        %v865 = vld [vmem:[%s839 + $0xc8] sm:$0xff]
        %v866 = vld [vmem:[%s839 + $0xd0] sm:$0xff]
        %v867 = vld [vmem:[%s839 + $0xd8] sm:$0xff]
        %v868 = vld [vmem:[%s839 + $0xe0] sm:$0xff]
        %v869 = vld [vmem:[%s839 + $0xe8] sm:$0xff]
        %v870 = vld [vmem:[%s839 + $0xf0] sm:$0xff]
        %v871 = vld [vmem:[%s839 + $0xf8] sm:$0xff]
        %vm876 = vcmask 1046528
        %v877 = vrot.slane %v313, 1
        %v878 = vrot.slane %v315, 1
        %v879 = vsel %vm876, %v877, %v878
        %v880 = vrot.slane %v314, 1
        %v881 = vrot.slane %v316, 1
        %v882 = vsel %vm876, %v880, %v881
        %v919 = vunpack.c.l.b16 %v840
        %v920 = vunpack.c.h.b16 %v840
        %v921 = vunpack.c.l.b16 %v841
        %v922 = vunpack.c.h.b16 %v841
        %v923 = vunpack.c.l.b16 %v842
        %v924 = vunpack.c.h.b16 %v842
        %v925 = vunpack.c.l.b16 %v843
        %v926 = vunpack.c.h.b16 %v843
        %v927 = vunpack.c.l.b16 %v844
        %v928 = vunpack.c.h.b16 %v844
        %v929 = vunpack.c.l.b16 %v845
        %v930 = vunpack.c.h.b16 %v845
        %v931 = vunpack.c.l.b16 %v846
        %v932 = vunpack.c.h.b16 %v846
        %v933 = vunpack.c.l.b16 %v847
        %v934 = vunpack.c.h.b16 %v847
        %v935 = vunpack.c.l.b16 %v848
        %v936 = vunpack.c.h.b16 %v848
        %v937 = vunpack.c.l.b16 %v849
        %v938 = vunpack.c.h.b16 %v849
        %v939 = vunpack.c.l.b16 %v850
        %v940 = vunpack.c.h.b16 %v850
        %v941 = vunpack.c.l.b16 %v851
        %v942 = vunpack.c.h.b16 %v851
        %v943 = vunpack.c.l.b16 %v852
        %v944 = vunpack.c.h.b16 %v852
        %v945 = vunpack.c.l.b16 %v853
        %v946 = vunpack.c.h.b16 %v853
        %v947 = vunpack.c.l.b16 %v854
        %v948 = vunpack.c.h.b16 %v854
        %v949 = vunpack.c.l.b16 %v855
        %v950 = vunpack.c.h.b16 %v855
        %v951 = vunpack.c.l.b16 %v856
        %v952 = vunpack.c.h.b16 %v856
        %v953 = vunpack.c.l.b16 %v857
        %v954 = vunpack.c.h.b16 %v857
        %v955 = vunpack.c.l.b16 %v858
        %v956 = vunpack.c.h.b16 %v858
        %v957 = vunpack.c.l.b16 %v859
        %v958 = vunpack.c.h.b16 %v859
        %v959 = vunpack.c.l.b16 %v860
        %v960 = vunpack.c.h.b16 %v860
        %v961 = vunpack.c.l.b16 %v861
        %v962 = vunpack.c.h.b16 %v861
        %v963 = vunpack.c.l.b16 %v862
        %v964 = vunpack.c.h.b16 %v862
        %v965 = vunpack.c.l.b16 %v863
        %v966 = vunpack.c.h.b16 %v863
        %v967 = vunpack.c.l.b16 %v864
        %v968 = vunpack.c.h.b16 %v864
        %v969 = vunpack.c.l.b16 %v865
        %v970 = vunpack.c.h.b16 %v865
        %v971 = vunpack.c.l.b16 %v866
        %v972 = vunpack.c.h.b16 %v866
        %v973 = vunpack.c.l.b16 %v867
        %v974 = vunpack.c.h.b16 %v867
        %v975 = vunpack.c.l.b16 %v868
        %v976 = vunpack.c.h.b16 %v868
        %v977 = vunpack.c.l.b16 %v869
        %v978 = vunpack.c.h.b16 %v869
        %v979 = vunpack.c.l.b16 %v870
        %v980 = vunpack.c.h.b16 %v870
        %v981 = vunpack.c.l.b16 %v871
        %v982 = vunpack.c.h.b16 %v871
        %v983 = vpack.c.b16 %v921, %v919
        %v984 = vpack.c.b16 %v922, %v920
        %v985 = vpack.c.b16 %v925, %v923
        %v986 = vpack.c.b16 %v926, %v924
        %v987 = vpack.c.b16 %v929, %v927
        %v988 = vpack.c.b16 %v930, %v928
        %v989 = vpack.c.b16 %v933, %v931
        %v990 = vpack.c.b16 %v934, %v932
        %v991 = vpack.c.b16 %v937, %v935
        %v992 = vpack.c.b16 %v938, %v936
        %v993 = vpack.c.b16 %v941, %v939
        %v994 = vpack.c.b16 %v942, %v940
        %v995 = vpack.c.b16 %v945, %v943
        %v996 = vpack.c.b16 %v946, %v944
        %v997 = vpack.c.b16 %v949, %v947
        %v998 = vpack.c.b16 %v950, %v948
        %v999 = vpack.c.b16 %v953, %v951
        %v1000 = vpack.c.b16 %v954, %v952
        %v1001 = vpack.c.b16 %v957, %v955
        %v1002 = vpack.c.b16 %v958, %v956
        %v1003 = vpack.c.b16 %v961, %v959
        %v1004 = vpack.c.b16 %v962, %v960
        %v1005 = vpack.c.b16 %v965, %v963
        %v1006 = vpack.c.b16 %v966, %v964
        %v1007 = vpack.c.b16 %v969, %v967
        %v1008 = vpack.c.b16 %v970, %v968
        %v1009 = vpack.c.b16 %v973, %v971
        %v1010 = vpack.c.b16 %v974, %v972
        %v1011 = vpack.c.b16 %v977, %v975
        %v1012 = vpack.c.b16 %v978, %v976
        %v1013 = vpack.c.b16 %v981, %v979
        %v1014 = vpack.c.b16 %v982, %v980
        %1047 = vmatprep.subr.bf16.mxu0 %v984
        %1048 = vmatpush1.bf16.msra.mxu0 %v983
        %1049 = vmatprep.subr.bf16.mxu0 %v986
        %1050 = vmatpush1.bf16.msra.mxu0 %v985
        %1051 = vmatprep.subr.bf16.mxu0 %v988
        %1052 = vmatpush1.bf16.msra.mxu0 %v987
        %1053 = vmatprep.subr.bf16.mxu0 %v990
        %1054 = vmatpush1.bf16.msra.mxu0 %v989
        %1055 = vmatprep.subr.bf16.mxu0 %v992
        %1056 = vmatpush1.bf16.msra.mxu0 %v991
        %1057 = vmatprep.subr.bf16.mxu0 %v994
        %1058 = vmatpush1.bf16.msra.mxu0 %v993
        %1059 = vmatprep.subr.bf16.mxu0 %v996
        %1060 = vmatpush1.bf16.msra.mxu0 %v995
        %1061 = vmatprep.subr.bf16.mxu0 %v998
        %1062 = vmatpush1.bf16.msra.mxu0 %v997
        %1063 = vmatprep.subr.bf16.mxu0 %v1000
        %1064 = vmatpush1.bf16.msra.mxu0 %v999
        %1065 = vmatprep.subr.bf16.mxu0 %v1002
        %1066 = vmatpush1.bf16.msra.mxu0 %v1001
        %1067 = vmatprep.subr.bf16.mxu0 %v1004
        %1068 = vmatpush1.bf16.msra.mxu0 %v1003
        %1069 = vmatprep.subr.bf16.mxu0 %v1006
        %1070 = vmatpush1.bf16.msra.mxu0 %v1005
        %1071 = vmatprep.subr.bf16.mxu0 %v1008
        %1072 = vmatpush1.bf16.msra.mxu0 %v1007
        %1073 = vmatprep.subr.bf16.mxu0 %v1010
        %1074 = vmatpush1.bf16.msra.mxu0 %v1009
        %1075 = vmatprep.subr.bf16.mxu0 %v1012
        %1076 = vmatpush1.bf16.msra.mxu0 %v1011
        %1077 = vmatprep.subr.bf16.mxu0 %v1014
        %1078 = vmatpush1.bf16.msra.mxu0 %v1013
        %1079 = vmatprep.mubr.bf16.mxu0 %v882
        %1080 = vmatmul.mubr.bf16.gmra.mrb[0].mxu0 %v879
        %v1081 = vpop.f32.mrb[0].mxu0
        %v1082 = vadd.f32 0.0, %v1081
        %v1083 = vpop.f32.mrb[0].mxu0
        %v1084 = vadd.f32 0.0, %v1083
        %v1085 = vpop.f32.mrb[0].mxu0
        %v1086 = vadd.f32 0.0, %v1085
        %v1087 = vpop.f32.mrb[0].mxu0
        %v1088 = vadd.f32 0.0, %v1087
        %1089 = vmatprep.mubr.bf16.mxu0 %v881
        %1090 = vmatmul.mubr.bf16.gmra.mrb[0].mxu0 %v878
        %v1091 = vpop.f32.mrb[0].mxu0
        %v1092 = vadd.f32 0.0, %v1091
        %v1093 = vpop.f32.mrb[0].mxu0
        %v1094 = vadd.f32 0.0, %v1093
        %v1095 = vpop.f32.mrb[0].mxu0
        %v1096 = vpop.f32.mrb[0].mxu0
        %1097 = vdwg.mxu0
        %v1098 = vadd.f32 %v823, %v1082
        %v1099 = vadd.f32 %v825, %v1084
        %v1100 = vadd.f32 %v827, %v1086
        %v1101 = vadd.f32 %v829, %v1088
        %v1102 = vadd.f32 %v833, %v1092
        %v1103 = vadd.f32 %v835, %v1094
        %v1104 = vld [vmem:[%s2] sm:$0x3]
        %v1106 = vlaneseq
        %v1107 = vshrl.u32 %v1106, 7
        %v1108 = vsub.s32 0, %v1107
        %v1109 = vrot.slane %v1104, %v1108
        %v1110 = vlaneseq
        %v1111 = vshrl.u32 %v1110, 7
        %v1112 = vsub.s32 1, %v1111
        %v1113 = vrot.slane %v1104, %v1112
        %v1116 = vmul.f32 %v1098, %v1109
        %v1117 = vmul.f32 %v1099, %v1113
        %v1118 = vmul.f32 %v1100, %v1109
        %v1119 = vmul.f32 %v1101, %v1113
        %v1120 = vmul.f32 %v1102, %v1109
        %v1121 = vmul.f32 %v1103, %v1113
        %v1122 = vld [vmem:[%s3] sm:$0x3]
        %v1124 = vlaneseq
        %v1125 = vshrl.u32 %v1124, 7
        %v1126 = vsub.s32 0, %v1125
        %v1127 = vrot.slane %v1122, %v1126
        %v1128 = vlaneseq
        %v1129 = vshrl.u32 %v1128, 7
        %v1130 = vsub.s32 1, %v1129
        %v1131 = vrot.slane %v1122, %v1130
        %v1134 = vadd.f32 %v1116, %v1127
        %v1135 = vadd.f32 %v1117, %v1131
        %v1136 = vadd.f32 %v1118, %v1127
        %v1137 = vadd.f32 %v1119, %v1131
        %v1138 = vadd.f32 %v1120, %v1127
        %v1139 = vadd.f32 %v1121, %v1131
        %vm1140 = vcmp.ge.f32.partialorder %v1134, 0.0
        %vm1141 = vcmp.ge.f32.partialorder %v1135, 0.0
        %vm1142 = vcmp.ge.f32.partialorder %v1136, 0.0
        %vm1143 = vcmp.ge.f32.partialorder %v1137, 0.0
        %vm1144 = vcmp.ge.f32.partialorder %v1138, 0.0
        %vm1145 = vcmp.ge.f32.partialorder %v1139, 0.0
        %v1146 = vmul.f32 %v1134, 0.1
        %v1147 = vmul.f32 %v1135, 0.1
        %v1148 = vmul.f32 %v1136, 0.1
        %v1149 = vmul.f32 %v1137, 0.1
        %v1150 = vmul.f32 %v1138, 0.1
        %v1151 = vmul.f32 %v1139, 0.1
        %v1152 = vsel %vm1140, %v1134, %v1146
        %v1153 = vsel %vm1141, %v1135, %v1147
        %v1154 = vsel %vm1142, %v1136, %v1148
        %v1155 = vsel %vm1143, %v1137, %v1149
        %v1156 = vsel %vm1144, %v1138, %v1150
        %v1157 = vsel %vm1145, %v1139, %v1151
        %v1158 = vlaneseq
        %v1159 = vshrl.u32 %v1158, 7
        %v1160 = vadd.s32 %v1159, 8
        %v1161 = vadd.s32 %v1159, 16
        %v1162 = vlaneseq
        %v1163 = vand.u32 %v1162, 127
        %v1164 = vadd.s32 %v1163, 128
        %vm1165 = vcmp.ge.s32.totalorder %v1159, 1
        %vm1166 = vcmp.ge.s32.totalorder %v1160, 1
        %vm1167 = vcmp.ge.s32.totalorder %v1161, 1
        %vm1168 = vcmp.lt.s32.totalorder %v1159, 17
        %vm1169 = vcmp.lt.s32.totalorder %v1160, 17
        %vm1170 = vcmp.lt.s32.totalorder %v1161, 17
        %vm1171 = vmand %vm1165, %vm1168
        %vm1172 = vmand %vm1166, %vm1169
        %vm1173 = vmand %vm1167, %vm1170
        %vm1174 = vcmp.ge.s32.totalorder %v1163, 16
        %vm1175 = vcmp.ge.s32.totalorder %v1164, 16
        %vm1176 = vmand %vm1171, %vm1174
        %vm1177 = vmand %vm1171, %vm1175
        %vm1178 = vmand %vm1172, %vm1174
        %vm1179 = vmand %vm1172, %vm1175
        %vm1180 = vmand %vm1173, %vm1174
        %vm1181 = vmand %vm1173, %vm1175
        %vm1182 = vcmp.lt.s32.totalorder %v1163, 144
        %vm1183 = vcmp.lt.s32.totalorder %v1164, 144
        %vm1184 = vmand %vm1176, %vm1182
        %vm1185 = vmand %vm1177, %vm1183
        %vm1186 = vmand %vm1178, %vm1182
        %vm1187 = vmand %vm1179, %vm1183
        %vm1188 = vmand %vm1180, %vm1182
        %vm1189 = vmand %vm1181, %vm1183
        %v1190 = vsel %vm1184, %v1152, 0.0
        %v1191 = vsel %vm1185, %v1153, 0.0
        %v1192 = vsel %vm1186, %v1154, 0.0
        %v1193 = vsel %vm1187, %v1155, 0.0
        %v1194 = vsel %vm1188, %v1156, 0.0
        %v1195 = vsel %vm1189, %v1157, 0.0
        %v1196 = vpack.c.bf16 %v1192, %v1190
        %v1197 = vpack.c.bf16 %v1193, %v1191
        %v1198 = vpack.c.bf16 %v1194, %v1194
        %v1199 = vpack.c.bf16 %v1195, %v1195
        %v1200 = vld [vmem:[#allocation5] sm:$0xff]
        %v1201 = vld [vmem:[#allocation5 + $0x8] sm:$0xff]
        %v1202 = vld [vmem:[#allocation5 + $0x10] sm:$0xff]
        %v1203 = vld [vmem:[#allocation5 + $0x18] sm:$0xff]
        %v1204 = vld [vmem:[#allocation5 + $0x20] sm:$0xff]
        %v1205 = vld [vmem:[#allocation5 + $0x28] sm:$0xff]
        %v1206 = vld [vmem:[#allocation5 + $0x30] sm:$0xff]
        %v1207 = vld [vmem:[#allocation5 + $0x38] sm:$0xff]
        %v1208 = vld [vmem:[#allocation5 + $0x40] sm:$0xff]
        %v1209 = vld [vmem:[#allocation5 + $0x48] sm:$0xff]
        %v1210 = vld [vmem:[#allocation5 + $0x50] sm:$0xff]
        %v1211 = vld [vmem:[#allocation5 + $0x58] sm:$0xff]
        %v1212 = vld [vmem:[#allocation5 + $0x60] sm:$0xff]
        %v1213 = vld [vmem:[#allocation5 + $0x68] sm:$0xff]
        %v1214 = vld [vmem:[#allocation5 + $0x70] sm:$0xff]
        %v1215 = vld [vmem:[#allocation5 + $0x78] sm:$0xff]
        %v1216 = vld [vmem:[#allocation5 + $0x80] sm:$0xff]
        %v1217 = vld [vmem:[#allocation5 + $0x88] sm:$0xff]
        %v1218 = vld [vmem:[#allocation5 + $0x90] sm:$0xff]
        %v1219 = vld [vmem:[#allocation5 + $0x98] sm:$0xff]
        %v1220 = vld [vmem:[#allocation5 + $0xa0] sm:$0xff]
        %v1221 = vld [vmem:[#allocation5 + $0xa8] sm:$0xff]
        %v1222 = vld [vmem:[#allocation5 + $0xb0] sm:$0xff]
        %v1223 = vld [vmem:[#allocation5 + $0xb8] sm:$0xff]
        %v1224 = vld [vmem:[#allocation5 + $0xc0] sm:$0xff]
        %v1225 = vld [vmem:[#allocation5 + $0xc8] sm:$0xff]
        %v1226 = vld [vmem:[#allocation5 + $0xd0] sm:$0xff]
        %v1227 = vld [vmem:[#allocation5 + $0xd8] sm:$0xff]
        %v1228 = vld [vmem:[#allocation5 + $0xe0] sm:$0xff]
        %v1229 = vld [vmem:[#allocation5 + $0xe8] sm:$0xff]
        %v1230 = vld [vmem:[#allocation5 + $0xf0] sm:$0xff]
        %v1231 = vld [vmem:[#allocation5 + $0xf8] sm:$0xff]
        %s1232 = scalar_lea.vmem [#allocation5], 256
        %v1233 = vld [vmem:[%s1232] sm:$0xff]
        %v1234 = vld [vmem:[%s1232 + $0x8] sm:$0xff]
        %v1235 = vld [vmem:[%s1232 + $0x10] sm:$0xff]
        %v1236 = vld [vmem:[%s1232 + $0x18] sm:$0xff]
        %v1237 = vld [vmem:[%s1232 + $0x20] sm:$0xff]
        %v1238 = vld [vmem:[%s1232 + $0x28] sm:$0xff]
        %v1239 = vld [vmem:[%s1232 + $0x30] sm:$0xff]
        %v1240 = vld [vmem:[%s1232 + $0x38] sm:$0xff]
        %v1241 = vld [vmem:[%s1232 + $0x40] sm:$0xff]
        %v1242 = vld [vmem:[%s1232 + $0x48] sm:$0xff]
        %v1243 = vld [vmem:[%s1232 + $0x50] sm:$0xff]
        %v1244 = vld [vmem:[%s1232 + $0x58] sm:$0xff]
        %v1245 = vld [vmem:[%s1232 + $0x60] sm:$0xff]
        %v1246 = vld [vmem:[%s1232 + $0x68] sm:$0xff]
        %v1247 = vld [vmem:[%s1232 + $0x70] sm:$0xff]
        %v1248 = vld [vmem:[%s1232 + $0x78] sm:$0xff]
        %v1249 = vld [vmem:[%s1232 + $0x80] sm:$0xff]
        %v1250 = vld [vmem:[%s1232 + $0x88] sm:$0xff]
        %v1251 = vld [vmem:[%s1232 + $0x90] sm:$0xff]
        %v1252 = vld [vmem:[%s1232 + $0x98] sm:$0xff]
        %v1253 = vld [vmem:[%s1232 + $0xa0] sm:$0xff]
        %v1254 = vld [vmem:[%s1232 + $0xa8] sm:$0xff]
        %v1255 = vld [vmem:[%s1232 + $0xb0] sm:$0xff]
        %v1256 = vld [vmem:[%s1232 + $0xb8] sm:$0xff]
        %v1257 = vld [vmem:[%s1232 + $0xc0] sm:$0xff]
        %v1258 = vld [vmem:[%s1232 + $0xc8] sm:$0xff]
        %v1259 = vld [vmem:[%s1232 + $0xd0] sm:$0xff]
        %v1260 = vld [vmem:[%s1232 + $0xd8] sm:$0xff]
        %v1261 = vld [vmem:[%s1232 + $0xe0] sm:$0xff]
        %v1262 = vld [vmem:[%s1232 + $0xe8] sm:$0xff]
        %v1263 = vld [vmem:[%s1232 + $0xf0] sm:$0xff]
        %v1264 = vld [vmem:[%s1232 + $0xf8] sm:$0xff]
        %v1266 = vshrl.u32 %v1196, 16
        %v1268 = vshll.u32 %v1196, 16
        %v1270 = vrot.slane %v1268, 1
        %v1271 = vor.u32 %v1266, %v1270
        %v1273 = vshll.u32 %v1198, 16
        %v1275 = vrot.slane %v1273, 1
        %v1276 = vsel %vm382, %v1271, %v1275
        %v1278 = vshrl.u32 %v1197, 16
        %v1280 = vshll.u32 %v1197, 16
        %v1282 = vrot.slane %v1280, 1
        %v1283 = vor.u32 %v1278, %v1282
        %v1285 = vshll.u32 %v1199, 16
        %v1287 = vrot.slane %v1285, 1
        %v1288 = vsel %vm382, %v1283, %v1287
        %v1323 = vunpack.c.l.b16 %v1233
        %v1324 = vunpack.c.h.b16 %v1233
        %v1325 = vunpack.c.l.b16 %v1234
        %v1326 = vunpack.c.h.b16 %v1234
        %v1327 = vunpack.c.l.b16 %v1235
        %v1328 = vunpack.c.h.b16 %v1235
        %v1329 = vunpack.c.l.b16 %v1236
        %v1330 = vunpack.c.h.b16 %v1236
        %v1331 = vunpack.c.l.b16 %v1237
        %v1332 = vunpack.c.h.b16 %v1237
        %v1333 = vunpack.c.l.b16 %v1238
        %v1334 = vunpack.c.h.b16 %v1238
        %v1335 = vunpack.c.l.b16 %v1239
        %v1336 = vunpack.c.h.b16 %v1239
        %v1337 = vunpack.c.l.b16 %v1240
        %v1338 = vunpack.c.h.b16 %v1240
        %v1339 = vunpack.c.l.b16 %v1241
        %v1340 = vunpack.c.h.b16 %v1241
        %v1341 = vunpack.c.l.b16 %v1242
        %v1342 = vunpack.c.h.b16 %v1242
        %v1343 = vunpack.c.l.b16 %v1243
        %v1344 = vunpack.c.h.b16 %v1243
        %v1345 = vunpack.c.l.b16 %v1244
        %v1346 = vunpack.c.h.b16 %v1244
        %v1347 = vunpack.c.l.b16 %v1245
        %v1348 = vunpack.c.h.b16 %v1245
        %v1349 = vunpack.c.l.b16 %v1246
        %v1350 = vunpack.c.h.b16 %v1246
        %v1351 = vunpack.c.l.b16 %v1247
        %v1352 = vunpack.c.h.b16 %v1247
        %v1353 = vunpack.c.l.b16 %v1248
        %v1354 = vunpack.c.h.b16 %v1248
        %v1355 = vunpack.c.l.b16 %v1249
        %v1356 = vunpack.c.h.b16 %v1249
        %v1357 = vunpack.c.l.b16 %v1250
        %v1358 = vunpack.c.h.b16 %v1250
        %v1359 = vunpack.c.l.b16 %v1251
        %v1360 = vunpack.c.h.b16 %v1251
        %v1361 = vunpack.c.l.b16 %v1252
        %v1362 = vunpack.c.h.b16 %v1252
        %v1363 = vunpack.c.l.b16 %v1253
        %v1364 = vunpack.c.h.b16 %v1253
        %v1365 = vunpack.c.l.b16 %v1254
        %v1366 = vunpack.c.h.b16 %v1254
        %v1367 = vunpack.c.l.b16 %v1255
        %v1368 = vunpack.c.h.b16 %v1255
        %v1369 = vunpack.c.l.b16 %v1256
        %v1370 = vunpack.c.h.b16 %v1256
        %v1371 = vunpack.c.l.b16 %v1257
        %v1372 = vunpack.c.h.b16 %v1257
        %v1373 = vunpack.c.l.b16 %v1258
        %v1374 = vunpack.c.h.b16 %v1258
        %v1375 = vunpack.c.l.b16 %v1259
        %v1376 = vunpack.c.h.b16 %v1259
        %v1377 = vunpack.c.l.b16 %v1260
        %v1378 = vunpack.c.h.b16 %v1260
        %v1379 = vunpack.c.l.b16 %v1261
        %v1380 = vunpack.c.h.b16 %v1261
        %v1381 = vunpack.c.l.b16 %v1262
        %v1382 = vunpack.c.h.b16 %v1262
        %v1383 = vunpack.c.l.b16 %v1263
        %v1384 = vunpack.c.h.b16 %v1263
        %v1385 = vunpack.c.l.b16 %v1264
        %v1386 = vunpack.c.h.b16 %v1264
        %v1387 = vpack.c.b16 %v1325, %v1323
        %v1388 = vpack.c.b16 %v1326, %v1324
        %v1389 = vpack.c.b16 %v1329, %v1327
        %v1390 = vpack.c.b16 %v1330, %v1328
        %v1391 = vpack.c.b16 %v1333, %v1331
        %v1392 = vpack.c.b16 %v1334, %v1332
        %v1393 = vpack.c.b16 %v1337, %v1335
        %v1394 = vpack.c.b16 %v1338, %v1336
        %v1395 = vpack.c.b16 %v1341, %v1339
        %v1396 = vpack.c.b16 %v1342, %v1340
        %v1397 = vpack.c.b16 %v1345, %v1343
        %v1398 = vpack.c.b16 %v1346, %v1344
        %v1399 = vpack.c.b16 %v1349, %v1347
        %v1400 = vpack.c.b16 %v1350, %v1348
        %v1401 = vpack.c.b16 %v1353, %v1351
        %v1402 = vpack.c.b16 %v1354, %v1352
        %v1403 = vpack.c.b16 %v1357, %v1355
        %v1404 = vpack.c.b16 %v1358, %v1356
        %v1405 = vpack.c.b16 %v1361, %v1359
        %v1406 = vpack.c.b16 %v1362, %v1360
        %v1407 = vpack.c.b16 %v1365, %v1363
        %v1408 = vpack.c.b16 %v1366, %v1364
        %v1409 = vpack.c.b16 %v1369, %v1367
        %v1410 = vpack.c.b16 %v1370, %v1368
        %v1411 = vpack.c.b16 %v1373, %v1371
        %v1412 = vpack.c.b16 %v1374, %v1372
        %v1413 = vpack.c.b16 %v1377, %v1375
        %v1414 = vpack.c.b16 %v1378, %v1376
        %v1415 = vpack.c.b16 %v1381, %v1379
        %v1416 = vpack.c.b16 %v1382, %v1380
        %v1417 = vpack.c.b16 %v1385, %v1383
        %v1418 = vpack.c.b16 %v1386, %v1384
        %1451 = vmatprep.subr.bf16.mxu0 %v1388
        %1452 = vmatpush1.bf16.msra.mxu0 %v1387
        %1453 = vmatprep.subr.bf16.mxu0 %v1390
        %1454 = vmatpush1.bf16.msra.mxu0 %v1389
        %1455 = vmatprep.subr.bf16.mxu0 %v1392
        %1456 = vmatpush1.bf16.msra.mxu0 %v1391
        %1457 = vmatprep.subr.bf16.mxu0 %v1394
        %1458 = vmatpush1.bf16.msra.mxu0 %v1393
        %1459 = vmatprep.subr.bf16.mxu0 %v1396
        %1460 = vmatpush1.bf16.msra.mxu0 %v1395
        %1461 = vmatprep.subr.bf16.mxu0 %v1398
        %1462 = vmatpush1.bf16.msra.mxu0 %v1397
        %1463 = vmatprep.subr.bf16.mxu0 %v1400
        %1464 = vmatpush1.bf16.msra.mxu0 %v1399
        %1465 = vmatprep.subr.bf16.mxu0 %v1402
        %1466 = vmatpush1.bf16.msra.mxu0 %v1401
        %1467 = vmatprep.subr.bf16.mxu0 %v1404
        %1468 = vmatpush1.bf16.msra.mxu0 %v1403
        %1469 = vmatprep.subr.bf16.mxu0 %v1406
        %1470 = vmatpush1.bf16.msra.mxu0 %v1405
        %1471 = vmatprep.subr.bf16.mxu0 %v1408
        %1472 = vmatpush1.bf16.msra.mxu0 %v1407
        %1473 = vmatprep.subr.bf16.mxu0 %v1410
        %1474 = vmatpush1.bf16.msra.mxu0 %v1409
        %1475 = vmatprep.subr.bf16.mxu0 %v1412
        %1476 = vmatpush1.bf16.msra.mxu0 %v1411
        %1477 = vmatprep.subr.bf16.mxu0 %v1414
        %1478 = vmatpush1.bf16.msra.mxu0 %v1413
        %1479 = vmatprep.subr.bf16.mxu0 %v1416
        %1480 = vmatpush1.bf16.msra.mxu0 %v1415
        %1481 = vmatprep.subr.bf16.mxu0 %v1418
        %1482 = vmatpush1.bf16.msra.mxu0 %v1417
        %1483 = vmatprep.mubr.bf16.mxu0 %v1288
        %1484 = vmatmul.mubr.bf16.gmra.mrb[0].mxu0 %v1276
        %v1485 = vpop.f32.mrb[0].mxu0
        %v1486 = vadd.f32 0.0, %v1485
        %v1487 = vpop.f32.mrb[0].mxu0
        %v1488 = vadd.f32 0.0, %v1487
        %v1489 = vpop.f32.mrb[0].mxu0
        %v1490 = vadd.f32 0.0, %v1489
        %v1491 = vpop.f32.mrb[0].mxu0
        %v1492 = vadd.f32 0.0, %v1491
        %1493 = vdwg.mxu0
        %v1526 = vunpack.c.l.b16 %v1200
        %v1527 = vunpack.c.h.b16 %v1200
        %v1528 = vunpack.c.l.b16 %v1201
        %v1529 = vunpack.c.h.b16 %v1201
        %v1530 = vunpack.c.l.b16 %v1202
        %v1531 = vunpack.c.h.b16 %v1202
        %v1532 = vunpack.c.l.b16 %v1203
        %v1533 = vunpack.c.h.b16 %v1203
        %v1534 = vunpack.c.l.b16 %v1204
        %v1535 = vunpack.c.h.b16 %v1204
        %v1536 = vunpack.c.l.b16 %v1205
        %v1537 = vunpack.c.h.b16 %v1205
        %v1538 = vunpack.c.l.b16 %v1206
        %v1539 = vunpack.c.h.b16 %v1206
        %v1540 = vunpack.c.l.b16 %v1207
        %v1541 = vunpack.c.h.b16 %v1207
        %v1542 = vunpack.c.l.b16 %v1208
        %v1543 = vunpack.c.h.b16 %v1208
        %v1544 = vunpack.c.l.b16 %v1209
        %v1545 = vunpack.c.h.b16 %v1209
        %v1546 = vunpack.c.l.b16 %v1210
        %v1547 = vunpack.c.h.b16 %v1210
        %v1548 = vunpack.c.l.b16 %v1211
        %v1549 = vunpack.c.h.b16 %v1211
        %v1550 = vunpack.c.l.b16 %v1212
        %v1551 = vunpack.c.h.b16 %v1212
        %v1552 = vunpack.c.l.b16 %v1213
        %v1553 = vunpack.c.h.b16 %v1213
        %v1554 = vunpack.c.l.b16 %v1214
        %v1555 = vunpack.c.h.b16 %v1214
        %v1556 = vunpack.c.l.b16 %v1215
        %v1557 = vunpack.c.h.b16 %v1215
        %v1558 = vunpack.c.l.b16 %v1216
        %v1559 = vunpack.c.h.b16 %v1216
        %v1560 = vunpack.c.l.b16 %v1217
        %v1561 = vunpack.c.h.b16 %v1217
        %v1562 = vunpack.c.l.b16 %v1218
        %v1563 = vunpack.c.h.b16 %v1218
        %v1564 = vunpack.c.l.b16 %v1219
        %v1565 = vunpack.c.h.b16 %v1219
        %v1566 = vunpack.c.l.b16 %v1220
        %v1567 = vunpack.c.h.b16 %v1220
        %v1568 = vunpack.c.l.b16 %v1221
        %v1569 = vunpack.c.h.b16 %v1221
        %v1570 = vunpack.c.l.b16 %v1222
        %v1571 = vunpack.c.h.b16 %v1222
        %v1572 = vunpack.c.l.b16 %v1223
        %v1573 = vunpack.c.h.b16 %v1223
        %v1574 = vunpack.c.l.b16 %v1224
        %v1575 = vunpack.c.h.b16 %v1224
        %v1576 = vunpack.c.l.b16 %v1225
        %v1577 = vunpack.c.h.b16 %v1225
        %v1578 = vunpack.c.l.b16 %v1226
        %v1579 = vunpack.c.h.b16 %v1226
        %v1580 = vunpack.c.l.b16 %v1227
        %v1581 = vunpack.c.h.b16 %v1227
        %v1582 = vunpack.c.l.b16 %v1228
        %v1583 = vunpack.c.h.b16 %v1228
        %v1584 = vunpack.c.l.b16 %v1229
        %v1585 = vunpack.c.h.b16 %v1229
        %v1586 = vunpack.c.l.b16 %v1230
        %v1587 = vunpack.c.h.b16 %v1230
        %v1588 = vunpack.c.l.b16 %v1231
        %v1589 = vunpack.c.h.b16 %v1231
        %v1590 = vpack.c.b16 %v1528, %v1526
        %v1591 = vpack.c.b16 %v1529, %v1527
        %v1592 = vpack.c.b16 %v1532, %v1530
        %v1593 = vpack.c.b16 %v1533, %v1531
        %v1594 = vpack.c.b16 %v1536, %v1534
        %v1595 = vpack.c.b16 %v1537, %v1535
        %v1596 = vpack.c.b16 %v1540, %v1538
        %v1597 = vpack.c.b16 %v1541, %v1539
        %v1598 = vpack.c.b16 %v1544, %v1542
        %v1599 = vpack.c.b16 %v1545, %v1543
        %v1600 = vpack.c.b16 %v1548, %v1546
        %v1601 = vpack.c.b16 %v1549, %v1547
        %v1602 = vpack.c.b16 %v1552, %v1550
        %v1603 = vpack.c.b16 %v1553, %v1551
        %v1604 = vpack.c.b16 %v1556, %v1554
        %v1605 = vpack.c.b16 %v1557, %v1555
        %v1606 = vpack.c.b16 %v1560, %v1558
        %v1607 = vpack.c.b16 %v1561, %v1559
        %v1608 = vpack.c.b16 %v1564, %v1562
        %v1609 = vpack.c.b16 %v1565, %v1563
        %v1610 = vpack.c.b16 %v1568, %v1566
        %v1611 = vpack.c.b16 %v1569, %v1567
        %v1612 = vpack.c.b16 %v1572, %v1570
        %v1613 = vpack.c.b16 %v1573, %v1571
        %v1614 = vpack.c.b16 %v1576, %v1574
        %v1615 = vpack.c.b16 %v1577, %v1575
        %v1616 = vpack.c.b16 %v1580, %v1578
        %v1617 = vpack.c.b16 %v1581, %v1579
        %v1618 = vpack.c.b16 %v1584, %v1582
        %v1619 = vpack.c.b16 %v1585, %v1583
        %v1620 = vpack.c.b16 %v1588, %v1586
        %v1621 = vpack.c.b16 %v1589, %v1587
        %1654 = vmatprep.subr.bf16.mxu0 %v1591
        %1655 = vmatpush1.bf16.msra.mxu0 %v1590
        %1656 = vmatprep.subr.bf16.mxu0 %v1593
        %1657 = vmatpush1.bf16.msra.mxu0 %v1592
        %1658 = vmatprep.subr.bf16.mxu0 %v1595
        %1659 = vmatpush1.bf16.msra.mxu0 %v1594
        %1660 = vmatprep.subr.bf16.mxu0 %v1597
        %1661 = vmatpush1.bf16.msra.mxu0 %v1596
        %1662 = vmatprep.subr.bf16.mxu0 %v1599
        %1663 = vmatpush1.bf16.msra.mxu0 %v1598
        %1664 = vmatprep.subr.bf16.mxu0 %v1601
        %1665 = vmatpush1.bf16.msra.mxu0 %v1600
        %1666 = vmatprep.subr.bf16.mxu0 %v1603
        %1667 = vmatpush1.bf16.msra.mxu0 %v1602
        %1668 = vmatprep.subr.bf16.mxu0 %v1605
        %1669 = vmatpush1.bf16.msra.mxu0 %v1604
        %1670 = vmatprep.subr.bf16.mxu0 %v1607
        %1671 = vmatpush1.bf16.msra.mxu0 %v1606
        %1672 = vmatprep.subr.bf16.mxu0 %v1609
        %1673 = vmatpush1.bf16.msra.mxu0 %v1608
        %1674 = vmatprep.subr.bf16.mxu0 %v1611
        %1675 = vmatpush1.bf16.msra.mxu0 %v1610
        %1676 = vmatprep.subr.bf16.mxu0 %v1613
        %1677 = vmatpush1.bf16.msra.mxu0 %v1612
        %1678 = vmatprep.subr.bf16.mxu0 %v1615
        %1679 = vmatpush1.bf16.msra.mxu0 %v1614
        %1680 = vmatprep.subr.bf16.mxu0 %v1617
        %1681 = vmatpush1.bf16.msra.mxu0 %v1616
        %1682 = vmatprep.subr.bf16.mxu0 %v1619
        %1683 = vmatpush1.bf16.msra.mxu0 %v1618
        %1684 = vmatprep.subr.bf16.mxu0 %v1621
        %1685 = vmatpush1.bf16.msra.mxu0 %v1620
        %1686 = vmatprep.mubr.bf16.mxu0 %v1197
        %1687 = vmatmul.mubr.bf16.gmra.mrb[0].mxu0 %v1196
        %v1688 = vpop.f32.mrb[0].mxu0
        %v1689 = vadd.f32 %v1486, %v1688
        %v1690 = vpop.f32.mrb[0].mxu0
        %v1691 = vadd.f32 %v1488, %v1690
        %v1692 = vpop.f32.mrb[0].mxu0
        %v1693 = vadd.f32 %v1490, %v1692
        %v1694 = vpop.f32.mrb[0].mxu0
        %v1695 = vadd.f32 %v1492, %v1694
        %1696 = vdwg.mxu0
        %s1697 = scalar_lea.vmem [#allocation5], 512
        %v1698 = vld [vmem:[%s1697] sm:$0xff]
        %v1699 = vld [vmem:[%s1697 + $0x8] sm:$0xff]
        %v1700 = vld [vmem:[%s1697 + $0x10] sm:$0xff]
        %v1701 = vld [vmem:[%s1697 + $0x18] sm:$0xff]
        %v1702 = vld [vmem:[%s1697 + $0x20] sm:$0xff]
        %v1703 = vld [vmem:[%s1697 + $0x28] sm:$0xff]
        %v1704 = vld [vmem:[%s1697 + $0x30] sm:$0xff]
        %v1705 = vld [vmem:[%s1697 + $0x38] sm:$0xff]
        %v1706 = vld [vmem:[%s1697 + $0x40] sm:$0xff]
        %v1707 = vld [vmem:[%s1697 + $0x48] sm:$0xff]
        %v1708 = vld [vmem:[%s1697 + $0x50] sm:$0xff]
        %v1709 = vld [vmem:[%s1697 + $0x58] sm:$0xff]
        %v1710 = vld [vmem:[%s1697 + $0x60] sm:$0xff]
        %v1711 = vld [vmem:[%s1697 + $0x68] sm:$0xff]
        %v1712 = vld [vmem:[%s1697 + $0x70] sm:$0xff]
        %v1713 = vld [vmem:[%s1697 + $0x78] sm:$0xff]
        %v1714 = vld [vmem:[%s1697 + $0x80] sm:$0xff]
        %v1715 = vld [vmem:[%s1697 + $0x88] sm:$0xff]
        %v1716 = vld [vmem:[%s1697 + $0x90] sm:$0xff]
        %v1717 = vld [vmem:[%s1697 + $0x98] sm:$0xff]
        %v1718 = vld [vmem:[%s1697 + $0xa0] sm:$0xff]
        %v1719 = vld [vmem:[%s1697 + $0xa8] sm:$0xff]
        %v1720 = vld [vmem:[%s1697 + $0xb0] sm:$0xff]
        %v1721 = vld [vmem:[%s1697 + $0xb8] sm:$0xff]
        %v1722 = vld [vmem:[%s1697 + $0xc0] sm:$0xff]
        %v1723 = vld [vmem:[%s1697 + $0xc8] sm:$0xff]
        %v1724 = vld [vmem:[%s1697 + $0xd0] sm:$0xff]
        %v1725 = vld [vmem:[%s1697 + $0xd8] sm:$0xff]
        %v1726 = vld [vmem:[%s1697 + $0xe0] sm:$0xff]
        %v1727 = vld [vmem:[%s1697 + $0xe8] sm:$0xff]
        %v1728 = vld [vmem:[%s1697 + $0xf0] sm:$0xff]
        %v1729 = vld [vmem:[%s1697 + $0xf8] sm:$0xff]
        %v1734 = vrot.slane %v1196, 1
        %v1735 = vrot.slane %v1198, 1
        %v1736 = vsel %vm876, %v1734, %v1735
        %v1737 = vrot.slane %v1197, 1
        %v1738 = vrot.slane %v1199, 1
        %v1739 = vsel %vm876, %v1737, %v1738
        %v1774 = vunpack.c.l.b16 %v1698
        %v1775 = vunpack.c.h.b16 %v1698
        %v1776 = vunpack.c.l.b16 %v1699
        %v1777 = vunpack.c.h.b16 %v1699
        %v1778 = vunpack.c.l.b16 %v1700
        %v1779 = vunpack.c.h.b16 %v1700
        %v1780 = vunpack.c.l.b16 %v1701
        %v1781 = vunpack.c.h.b16 %v1701
        %v1782 = vunpack.c.l.b16 %v1702
        %v1783 = vunpack.c.h.b16 %v1702
        %v1784 = vunpack.c.l.b16 %v1703
        %v1785 = vunpack.c.h.b16 %v1703
        %v1786 = vunpack.c.l.b16 %v1704
        %v1787 = vunpack.c.h.b16 %v1704
        %v1788 = vunpack.c.l.b16 %v1705
        %v1789 = vunpack.c.h.b16 %v1705
        %v1790 = vunpack.c.l.b16 %v1706
        %v1791 = vunpack.c.h.b16 %v1706
        %v1792 = vunpack.c.l.b16 %v1707
        %v1793 = vunpack.c.h.b16 %v1707
        %v1794 = vunpack.c.l.b16 %v1708
        %v1795 = vunpack.c.h.b16 %v1708
        %v1796 = vunpack.c.l.b16 %v1709
        %v1797 = vunpack.c.h.b16 %v1709
        %v1798 = vunpack.c.l.b16 %v1710
        %v1799 = vunpack.c.h.b16 %v1710
        %v1800 = vunpack.c.l.b16 %v1711
        %v1801 = vunpack.c.h.b16 %v1711
        %v1802 = vunpack.c.l.b16 %v1712
        %v1803 = vunpack.c.h.b16 %v1712
        %v1804 = vunpack.c.l.b16 %v1713
        %v1805 = vunpack.c.h.b16 %v1713
        %v1806 = vunpack.c.l.b16 %v1714
        %v1807 = vunpack.c.h.b16 %v1714
        %v1808 = vunpack.c.l.b16 %v1715
        %v1809 = vunpack.c.h.b16 %v1715
        %v1810 = vunpack.c.l.b16 %v1716
        %v1811 = vunpack.c.h.b16 %v1716
        %v1812 = vunpack.c.l.b16 %v1717
        %v1813 = vunpack.c.h.b16 %v1717
        %v1814 = vunpack.c.l.b16 %v1718
        %v1815 = vunpack.c.h.b16 %v1718
        %v1816 = vunpack.c.l.b16 %v1719
        %v1817 = vunpack.c.h.b16 %v1719
        %v1818 = vunpack.c.l.b16 %v1720
        %v1819 = vunpack.c.h.b16 %v1720
        %v1820 = vunpack.c.l.b16 %v1721
        %v1821 = vunpack.c.h.b16 %v1721
        %v1822 = vunpack.c.l.b16 %v1722
        %v1823 = vunpack.c.h.b16 %v1722
        %v1824 = vunpack.c.l.b16 %v1723
        %v1825 = vunpack.c.h.b16 %v1723
        %v1826 = vunpack.c.l.b16 %v1724
        %v1827 = vunpack.c.h.b16 %v1724
        %v1828 = vunpack.c.l.b16 %v1725
        %v1829 = vunpack.c.h.b16 %v1725
        %v1830 = vunpack.c.l.b16 %v1726
        %v1831 = vunpack.c.h.b16 %v1726
        %v1832 = vunpack.c.l.b16 %v1727
        %v1833 = vunpack.c.h.b16 %v1727
        %v1834 = vunpack.c.l.b16 %v1728
        %v1835 = vunpack.c.h.b16 %v1728
        %v1836 = vunpack.c.l.b16 %v1729
        %v1837 = vunpack.c.h.b16 %v1729
        %v1838 = vpack.c.b16 %v1776, %v1774
        %v1839 = vpack.c.b16 %v1777, %v1775
        %v1840 = vpack.c.b16 %v1780, %v1778
        %v1841 = vpack.c.b16 %v1781, %v1779
        %v1842 = vpack.c.b16 %v1784, %v1782
        %v1843 = vpack.c.b16 %v1785, %v1783
        %v1844 = vpack.c.b16 %v1788, %v1786
        %v1845 = vpack.c.b16 %v1789, %v1787
        %v1846 = vpack.c.b16 %v1792, %v1790
        %v1847 = vpack.c.b16 %v1793, %v1791
        %v1848 = vpack.c.b16 %v1796, %v1794
        %v1849 = vpack.c.b16 %v1797, %v1795
        %v1850 = vpack.c.b16 %v1800, %v1798
        %v1851 = vpack.c.b16 %v1801, %v1799
        %v1852 = vpack.c.b16 %v1804, %v1802
        %v1853 = vpack.c.b16 %v1805, %v1803
        %v1854 = vpack.c.b16 %v1808, %v1806
        %v1855 = vpack.c.b16 %v1809, %v1807
        %v1856 = vpack.c.b16 %v1812, %v1810
        %v1857 = vpack.c.b16 %v1813, %v1811
        %v1858 = vpack.c.b16 %v1816, %v1814
        %v1859 = vpack.c.b16 %v1817, %v1815
        %v1860 = vpack.c.b16 %v1820, %v1818
        %v1861 = vpack.c.b16 %v1821, %v1819
        %v1862 = vpack.c.b16 %v1824, %v1822
        %v1863 = vpack.c.b16 %v1825, %v1823
        %v1864 = vpack.c.b16 %v1828, %v1826
        %v1865 = vpack.c.b16 %v1829, %v1827
        %v1866 = vpack.c.b16 %v1832, %v1830
        %v1867 = vpack.c.b16 %v1833, %v1831
        %v1868 = vpack.c.b16 %v1836, %v1834
        %v1869 = vpack.c.b16 %v1837, %v1835
        %1902 = vmatprep.subr.bf16.mxu0 %v1839
        %1903 = vmatpush1.bf16.msra.mxu0 %v1838
        %1904 = vmatprep.subr.bf16.mxu0 %v1841
        %1905 = vmatpush1.bf16.msra.mxu0 %v1840
        %1906 = vmatprep.subr.bf16.mxu0 %v1843
        %1907 = vmatpush1.bf16.msra.mxu0 %v1842
        %1908 = vmatprep.subr.bf16.mxu0 %v1845
        %1909 = vmatpush1.bf16.msra.mxu0 %v1844
        %1910 = vmatprep.subr.bf16.mxu0 %v1847
        %1911 = vmatpush1.bf16.msra.mxu0 %v1846
        %1912 = vmatprep.subr.bf16.mxu0 %v1849
        %1913 = vmatpush1.bf16.msra.mxu0 %v1848
        %1914 = vmatprep.subr.bf16.mxu0 %v1851
        %1915 = vmatpush1.bf16.msra.mxu0 %v1850
        %1916 = vmatprep.subr.bf16.mxu0 %v1853
        %1917 = vmatpush1.bf16.msra.mxu0 %v1852
        %1918 = vmatprep.subr.bf16.mxu0 %v1855
        %1919 = vmatpush1.bf16.msra.mxu0 %v1854
        %1920 = vmatprep.subr.bf16.mxu0 %v1857
        %1921 = vmatpush1.bf16.msra.mxu0 %v1856
        %1922 = vmatprep.subr.bf16.mxu0 %v1859
        %1923 = vmatpush1.bf16.msra.mxu0 %v1858
        %1924 = vmatprep.subr.bf16.mxu0 %v1861
        %1925 = vmatpush1.bf16.msra.mxu0 %v1860
        %1926 = vmatprep.subr.bf16.mxu0 %v1863
        %1927 = vmatpush1.bf16.msra.mxu0 %v1862
        %1928 = vmatprep.subr.bf16.mxu0 %v1865
        %1929 = vmatpush1.bf16.msra.mxu0 %v1864
        %1930 = vmatprep.subr.bf16.mxu0 %v1867
        %1931 = vmatpush1.bf16.msra.mxu0 %v1866
        %1932 = vmatprep.subr.bf16.mxu0 %v1869
        %1933 = vmatpush1.bf16.msra.mxu0 %v1868
        %1934 = vmatprep.mubr.bf16.mxu0 %v1739
        %1935 = vmatmul.mubr.bf16.gmra.mrb[0].mxu0 %v1736
        %v1936 = vpop.f32.mrb[0].mxu0
        %v1937 = vadd.f32 0.0, %v1936
        %v1938 = vpop.f32.mrb[0].mxu0
        %v1939 = vadd.f32 0.0, %v1938
        %v1940 = vpop.f32.mrb[0].mxu0
        %v1941 = vadd.f32 0.0, %v1940
        %v1942 = vpop.f32.mrb[0].mxu0
        %v1943 = vadd.f32 0.0, %v1942
        %1944 = vdwg.mxu0
        %v1945 = vadd.f32 %v1689, %v1937
        %v1946 = vadd.f32 %v1691, %v1939
        %v1947 = vadd.f32 %v1693, %v1941
        %v1948 = vadd.f32 %v1695, %v1943
        %v1949 = vld [vmem:[%s5] sm:$0x3]
        %v1951 = vlaneseq
        %v1952 = vshrl.u32 %v1951, 7
        %v1953 = vsub.s32 0, %v1952
        %v1954 = vrot.slane %v1949, %v1953
        %v1955 = vlaneseq
        %v1956 = vshrl.u32 %v1955, 7
        %v1957 = vsub.s32 1, %v1956
        %v1958 = vrot.slane %v1949, %v1957
        %v1961 = vmul.f32 %v1945, %v1954
        %v1962 = vmul.f32 %v1946, %v1958
        %v1963 = vmul.f32 %v1947, %v1954
        %v1964 = vmul.f32 %v1948, %v1958
        %v1965 = vld [vmem:[%s6] sm:$0x3]
        %v1967 = vlaneseq
        %v1968 = vshrl.u32 %v1967, 7
        %v1969 = vsub.s32 0, %v1968
        %v1970 = vrot.slane %v1965, %v1969
        %v1971 = vlaneseq
        %v1972 = vshrl.u32 %v1971, 7
        %v1973 = vsub.s32 1, %v1972
        %v1974 = vrot.slane %v1965, %v1973
        %v1977 = vadd.f32 %v1961, %v1970
        %v1978 = vadd.f32 %v1962, %v1974
        %v1979 = vadd.f32 %v1963, %v1970
        %v1980 = vadd.f32 %v1964, %v1974
        %vm1987 = vcmask 1045504
        %v1988 = vrot.slane %v307, 2
        %v1989 = vrot.slane %v309, 2
        %v1990 = vsel %vm1987, %v1988, %v1989
        %v1991 = vrot.slane %v308, 2
        %v1992 = vrot.slane %v310, 2
        %v1993 = vsel %vm1987, %v1991, %v1992
        %v1994 = vrot.slane %v311, 2
        %v1995 = vsel %vm1987, %v1989, %v1994
        %v1996 = vrot.slane %v312, 2
        %v1997 = vsel %vm1987, %v1992, %v1996
        %v2002 = vadd.f32 %v1977, %v1990
        %v2003 = vadd.f32 %v1978, %v1993
        %v2004 = vadd.f32 %v1979, %v1995
        %v2005 = vadd.f32 %v1980, %v1997
        %vm2006 = vcmp.ge.f32.partialorder %v2002, 0.0
        %vm2007 = vcmp.ge.f32.partialorder %v2003, 0.0
        %vm2008 = vcmp.ge.f32.partialorder %v2004, 0.0
        %vm2009 = vcmp.ge.f32.partialorder %v2005, 0.0
        %v2010 = vmul.f32 %v2002, 0.1
        %v2011 = vmul.f32 %v2003, 0.1
        %v2012 = vmul.f32 %v2004, 0.1
        %v2013 = vmul.f32 %v2005, 0.1
        %v2014 = vsel %vm2006, %v2002, %v2010
        %v2015 = vsel %vm2007, %v2003, %v2011
        %v2016 = vsel %vm2008, %v2004, %v2012
        %v2017 = vsel %vm2009, %v2005, %v2013
        %2018 = vst [vmem:[%s301] sm:$0xff] %v2014
        %2019 = vst [vmem:[%s301 + $0x8] sm:$0xff] %v2015
        %2020 = vst [vmem:[%s301 + $0x10] sm:$0xff] %v2016
        %2021 = vst [vmem:[%s301 + $0x18] sm:$0xff] %v2017
        %s2022 = sand.u32 %s183, 1
        %s2023 = scalar_lea.sflag [#allocation4], %s2022
        %s2024 = sand.u32 %s183, 1
        %s2025 = smul.addr %s2024, 32
        %s2026 = scalar_lea.vmem [#allocation7], %s2025
        // Predicated region
        $region57: #{tpu_custom_call.1} parent=47 // pred_check
          %p2027 = pneg %p193
        $region58: #{tpu_custom_call.1} parent=47 // pred_check_branch
          %2029 = sbr.rel (%p2027) target = $region60
        $region59: #{tpu_custom_call.1} parent=47 // pred_region
          %s2031 = ssub.s32 512, 512
          %2032 = vsyncadd %s2023, %s2031
          %s2033 = smul.addr %s23, 4
          %s2034 = smul.addr %s2033, 128
          %s2035 = scalar_lea.hbm %s7, %s2034
          %s2036 = sshll.u32 %s2026, 4
          %s2037 = int_to_ptr.vmem [resolvable:$true] %s2036
          %2042 = dma.vmem_to_hbm [thread:$0]  %s2037, 512, %s2035, %s2023, 256, 256, 16
        $region60: #{tpu_custom_call.1} parent=47 // pred_fallthru
          _
      $region48: #{tpu_custom_call.1} parent=5 // pred_fallthru
        _
      %p2043 = scmp.le.s32.totalorder 2, %s18
      // Predicated region
      $region61: #{tpu_custom_call.1} parent=5 // pred_check
        %p2044 = pneg %p2043
      $region62: #{tpu_custom_call.1} parent=5 // pred_check_branch
        %2046 = sbr.rel (%p2044) target = $region64
      $region63: #{tpu_custom_call.1} parent=5 // pred_region
        %s2047 = ssub.s32 %s18, 2
        // Predicated region
        $region65: #{tpu_custom_call.1} parent=63 // pred_check
          %p2048 = pneg %p199
        $region66: #{tpu_custom_call.1} parent=63 // pred_check_branch
          %2050 = sbr.rel (%p2048) target = $region68
        $region67: #{tpu_custom_call.1} parent=63 // pred_region
          %s2051 = sand.u32 %s184, 1
          %s2052 = scalar_lea.sflag [#allocation4], %s2051
          %s2053 = sand.u32 %s184, 1
          %s2054 = smul.addr %s2053, 32
          %s2055 = scalar_lea.vmem [#allocation7], %s2054
          %2056 = dma.done %s2052, 512
        $region68: #{tpu_custom_call.1} parent=63 // pred_fallthru
          _
      $region64: #{tpu_custom_call.1} parent=5 // pred_fallthru
        _
    $region6: #{tpu_custom_call.1} parent=1 // loop_footer
      %s22 = sadd.s32 1, %s18
    $region7: #{tpu_custom_call.1} parent=1 // loop_footer_branch
      %17 = sbr.rel target = $region3
    $region8: #{tpu_custom_call.1} parent=1 // loop_exit
      _
    %2057 = vsyncpa [#allocation3], 1
    %s2058 = scalar_lea.sflag [#allocation3], 1
    %2059 = vsyncpa %s2058, 1
    %2060 = vsyncpa [#allocation6], 1
    %2061 = vsyncpa [#allocation4], 1
    %s2062 = scalar_lea.sflag [#allocation4], 1
    %2063 = vsyncpa %s2062, 1

</llo_original>
